<compile_context>
chip_gen: v5e
topology: v5e:2x2
jax: 0.10.0
libtpu: 0.0.40
codegen_flags: <defaults>
</compile_context>

<pallas_src>
import numpy as np
import jax
import jax.numpy as jnp
from jax import lax
from jax.experimental import pallas as pl
from jax.experimental.pallas import tpu as pltpu

K = 3  # kernel_size == stride for nn.MaxPool2d(3)


def _maxpool_kernel(x_ref, wsel_ref, hsel_ref, o_ref):
    """One block of Cb channel planes per grid step.

    x_ref    : (Cb*H, W)   input rows (lanes = W), input dtype
    wsel_ref : (W,  Wo)    0/1 column downsample (one 1.0 per column)
    hsel_ref : (Ho, H)     0/1 row downsample, shared across channels
    o_ref    : (Cb*Ho, Wo) pooled output, input dtype
    """
    R, W = x_ref.shape                      # R = Cb * H
    Ho, H = hsel_ref.shape
    Wo = wsel_ref.shape[1]
    Cb = R // H

    x = x_ref[...]                          # keep input dtype (bf16 stays bf16)
    neg_x = jnp.finfo(x.dtype).min          # finite "minus infinity" (avoids 0*inf=NaN)

    # ---- W direction: 3-tap window max via shifted views (VPU max chain).
    #      The appended `neg_x` columns implement the ceil_mode right edge; when
    #      W % 3 == 0 they are simply never selected downstream.
    t1 = jnp.concatenate([x[:, 1:], jnp.full((R, 1), neg_x, x.dtype)], axis=1)
    t2 = jnp.concatenate([x[:, 2:], jnp.full((R, 2), neg_x, x.dtype)], axis=1)
    mw = jnp.maximum(x, jnp.maximum(t1, t2))                       # (R, W)

    # ---- Column downsample: pick window starts 0,3,6,...  One 1.0 per output
    #      column -> exact gather (HIGHEST keeps the f32 path bit-exact).
    cw = jnp.dot(mw, wsel_ref[...],
                 preferred_element_type=jnp.float32,
                 precision=lax.Precision.HIGHEST)                  # (R, Wo) f32

    # ---- H direction: 3-tap window max on the f32 accumulators (sublane shifts).
    negf = np.float32(np.finfo(np.float32).min)
    s1 = jnp.concatenate([cw[1:, :], jnp.full((1, Wo), negf, jnp.float32)], axis=0)
    s2 = jnp.concatenate([cw[2:, :], jnp.full((2, Wo), negf, jnp.float32)], axis=0)
    if H % 3 != 0:
        # ceil_mode ragged bottom edge: taps that would cross a channel boundary
        # inside the (Cb*H, Wo) slab are masked.  (When H % 3 == 0 no selected
        # row ever reads a cross-channel tap, so this is skipped entirely.)
        h_idx = lax.broadcasted_iota(jnp.int32, (R, Wo), 0) % H
        s1 = jnp.where(h_idx < H - 1, s1, negf)
        s2 = jnp.where(h_idx < H - 2, s2, negf)
    mh = jnp.maximum(cw, jnp.maximum(s1, s2))                      # (R, Wo) f32

    # ---- Row downsample, per channel, with the shared (Ho, H) one-hot table.
    hsel = hsel_ref[...]
    for c in range(Cb):
        oc = jnp.dot(hsel, mh[c * H:(c + 1) * H, :],
                     preferred_element_type=jnp.float32,
                     precision=lax.Precision.HIGHEST)              # (Ho, Wo)
        o_ref[c * Ho:(c + 1) * Ho, :] = oc.astype(o_ref.dtype)


def _downsample_tables(H, W, Ho, Wo):
    """0/1 stride-3 selection matrices (trace-time numpy constants)."""
    wsel = np.zeros((W, Wo), np.float32)
    wsel[np.arange(Wo) * K, np.arange(Wo)] = 1.0      # column j <- column 3j
    hsel = np.zeros((Ho, H), np.float32)
    hsel[np.arange(Ho), np.arange(Ho) * K] = 1.0      # row i <- row 3i
    return wsel, hsel


def _vmem_limit_bytes():
    """vmem_limit sized from the actual chip (v7x: 64 MiB, v5e/v6e: 128 MiB)."""
    cap = None
    try:
        cap = getattr(pltpu.get_tpu_info(), "vmem_capacity_bytes", None)
    except Exception:
        cap = None
    if not cap:
        cap = 64 * 1024 * 1024          # conservative: v7x per-TensorCore VMEM
    return int(cap) * 3 // 4            # leave headroom for the compiler


def _pick_block_channels(NC, H, W, Ho, Wo, itemsize, budget_bytes):
    """Largest Cb (divisor of N*C) whose blocks are (8,128)-legal, fit the VMEM
    budget, and keep the grid multi-step so both v7x TensorCores get work."""
    cands = []
    for d in range(1, NC + 1):
        if NC % d:
            continue
        row_ok = (d * H) % 8 == 0 or d == NC
        out_ok = (d * Ho) % 8 == 0 or d == NC
        if row_ok and out_ok:
            cands.append(d)

    def footprint(d):
        in_b = 2 * d * H * W * itemsize                  # double-buffered input
        out_b = 2 * d * Ho * Wo * itemsize
        tmp_b = 3 * d * H * W * itemsize + 3 * d * H * Wo * 4   # tap-max + f32 temps
        tbl_b = W * Wo * itemsize + Ho * H * 4
        return in_b + out_b + tmp_b + tbl_b

    fitting = [d for d in cands if footprint(d) <= budget_bytes] or [cands[0]]
    for min_steps in (4, 2, 1):
        ok = [d for d in fitting if NC // d >= min_steps]
        if ok:
            return max(ok)
    return max(fitting)


@jax.jit
def maxpool2d_ceil(x):
    """nn.MaxPool2d(kernel_size=3, ceil_mode=True) forward. x: (N, C, H, W) float."""
    if not jnp.issubdtype(x.dtype, jnp.floating):
        raise NotImplementedError("float inputs only")   # TODO(synk): integer path
    N, C, H, W = x.shape
    Ho = -(-H // K)                     # ceil(H / 3)
    Wo = -(-W // K)                     # ceil(W / 3)
    NC = N * C
    itemsize = jnp.dtype(x.dtype).itemsize

    vmem_limit = _vmem_limit_bytes()
    Cb = _pick_block_channels(NC, H, W, Ho, Wo, itemsize, budget_bytes=vmem_limit // 2)

    wsel_np, hsel_np = _downsample_tables(H, W, Ho, Wo)
    wsel = jnp.asarray(wsel_np, dtype=x.dtype)   # MXU operand stays in input dtype
    hsel = jnp.asarray(hsel_np, dtype=jnp.float32)

    # Free, contiguous reshapes (pure metadata): NCHW -> (N*C*H, W) and back.
    x2d = x.reshape(NC * H, W)

    out2d = pl.pallas_call(
        _maxpool_kernel,
        out_shape=jax.ShapeDtypeStruct((NC * Ho, Wo), x.dtype),
        grid=(NC // Cb,),
        in_specs=[
            pl.BlockSpec((Cb * H, W), lambda i: (i, 0)),
            pl.BlockSpec((W, Wo), lambda i: (0, 0)),
            pl.BlockSpec((Ho, H), lambda i: (0, 0)),
        ],
        out_specs=pl.BlockSpec((Cb * Ho, Wo), lambda i: (i, 0)),
        compiler_params=pltpu.CompilerParams(
            dimension_semantics=("parallel",),
            vmem_limit_bytes=vmem_limit,
        ),
    )(x2d, wsel, hsel)

    return out2d.reshape(N, C, Ho, Wo)


def _reference(x):
    # Pure-JAX reference reproducing MaxPool2d(3, ceil_mode=True).
    N, C, H, W = x.shape
    Ho = -(-H // K)
    Wo = -(-W // K)
    return lax.reduce_window(
        x, -jnp.inf, lax.max,
        window_dimensions=(1, 1, K, K),
        window_strides=(1, 1, K, K),
        padding=((0, 0), (0, 0), (0, Ho * K - H), (0, Wo * K - W)),
    )


if __name__ == "__main__":
    key = jax.random.PRNGKey(0)
    x = jax.random.normal(key, (2, 4, 16, 16), dtype=jnp.float32)  # NCHW

    out = jax.block_until_ready(maxpool2d_ceil(x))
    assert out.shape == (2, 4, 6, 6), out.shape

    ref = _reference(x)
    # Max-pool must return an actual input element.  The tap maxima are true
    # VPU maxes and the 0/1 downsample gathers are exact (single 1.0 weight,
    # HIGHEST-precision f32 accumulation), so this should be bit-exact; the
    # tiny tolerance only guards against sub-ulp accumulation-order quirks.
    assert jnp.allclose(out, ref, rtol=1e-6, atol=1e-6), "mismatch vs reference max-pool"

    print("KERNEL_OK")
</pallas_src>

<mosaic_0001>
module attributes {stable_mosaic.version = 11 : i64} {
  func.func @_maxpool_kernel(%arg0: i32, %arg1: memref<64x16xf32, #tpu.memory_space<vmem>>, %arg2: memref<16x6xf32, #tpu.memory_space<vmem>>, %arg3: memref<6x16xf32, #tpu.memory_space<vmem>>, %arg4: memref<24x6xf32, #tpu.memory_space<vmem>>) attributes {dimension_semantics = [#tpu.dimension_semantics<parallel>], iteration_bounds = array<i64: 2>, scalar_prefetch = 0 : i64, scratch_operands = 0 : i64, tpu.core_type = #tpu.core_type<tc>, window_params = [{transform_indices = @transform_0, window_bounds = array<i64: 64, 16>}, {pipeline_mode = #tpu.pipeline_mode<synchronous>, transform_indices = @transform_1, window_bounds = array<i64: 16, 6>}, {pipeline_mode = #tpu.pipeline_mode<synchronous>, transform_indices = @transform_2, window_bounds = array<i64: 6, 16>}, {transform_indices = @transform_3, window_bounds = array<i64: 24, 6>}]} {
    %c0 = arith.constant 0 : index
    %c0_0 = arith.constant 0 : index
    %0 = vector.load %arg1[%c0, %c0_0] : memref<64x16xf32, #tpu.memory_space<vmem>>, vector<64x16xf32>
    %1 = vector.extract_strided_slice %0 {offsets = [0, 1], sizes = [64, 15], strides = [1, 1]} : vector<64x16xf32> to vector<64x15xf32>
    %cst = arith.constant -3.40282347E+38 : f32
    %2 = vector.broadcast %cst : f32 to vector<64x1xf32>
    %3 = tpu.concatenate %1, %2 in 1 : vector<64x15xf32>, vector<64x1xf32> -> vector<64x16xf32>
    %4 = vector.extract_strided_slice %0 {offsets = [0, 2], sizes = [64, 14], strides = [1, 1]} : vector<64x16xf32> to vector<64x14xf32>
    %cst_1 = arith.constant -3.40282347E+38 : f32
    %5 = vector.broadcast %cst_1 : f32 to vector<64x2xf32>
    %6 = tpu.concatenate %4, %5 in 1 : vector<64x14xf32>, vector<64x2xf32> -> vector<64x16xf32>
    %7 = arith.maximumf %3, %6 : vector<64x16xf32>
    %8 = arith.maximumf %0, %7 : vector<64x16xf32>
    %c0_2 = arith.constant 0 : index
    %c0_3 = arith.constant 0 : index
    %9 = vector.load %arg2[%c0_2, %c0_3] : memref<16x6xf32, #tpu.memory_space<vmem>>, vector<16x6xf32>
    %cst_4 = arith.constant dense<0.000000e+00> : vector<64x6xf32>
    %10 = tpu.matmul %8, %9, %cst_4 {dimension_numbers = #tpu.dot_dimension_numbers<[1], [0], [0], [1], [0, 0, 1, 1], [], []>, precision = #tpu.contract_precision<fp32>} : vector<64x16xf32>, vector<16x6xf32>, vector<64x6xf32> -> vector<64x6xf32>
    %11 = vector.extract_strided_slice %10 {offsets = [1, 0], sizes = [63, 6], strides = [1, 1]} : vector<64x6xf32> to vector<63x6xf32>
    %cst_5 = arith.constant -3.40282347E+38 : f32
    %12 = vector.broadcast %cst_5 : f32 to vector<1x6xf32>
    %13 = tpu.concatenate %11, %12 in 0 : vector<63x6xf32>, vector<1x6xf32> -> vector<64x6xf32>
    %14 = vector.extract_strided_slice %10 {offsets = [2, 0], sizes = [62, 6], strides = [1, 1]} : vector<64x6xf32> to vector<62x6xf32>
    %cst_6 = arith.constant -3.40282347E+38 : f32
    %15 = vector.broadcast %cst_6 : f32 to vector<2x6xf32>
    %16 = tpu.concatenate %14, %15 in 0 : vector<62x6xf32>, vector<2x6xf32> -> vector<64x6xf32>
    %17 = tpu.iota {dimensions = array<i32: 0>} : vector<64x6xi32>
    %c16_i32 = arith.constant 16 : i32
    %c0_i32 = arith.constant 0 : i32
    %18 = arith.cmpi eq, %c16_i32, %c0_i32 : i32
    %c1_i32 = arith.constant 1 : i32
    %19 = arith.select %18, %c1_i32, %c16_i32 : i32
    %20 = vector.broadcast %19 : i32 to vector<64x6xi32>
    %21 = arith.remsi %17, %20 : vector<64x6xi32>
    %c0_i32_7 = arith.constant 0 : i32
    %22 = vector.broadcast %c0_i32_7 : i32 to vector<64x6xi32>
    %23 = arith.cmpi ne, %21, %22 : vector<64x6xi32>
    %c0_i32_8 = arith.constant 0 : i32
    %24 = vector.broadcast %c0_i32_8 : i32 to vector<64x6xi32>
    %25 = arith.cmpi slt, %21, %24 : vector<64x6xi32>
    %c0_i32_9 = arith.constant 0 : i32
    %26 = arith.cmpi slt, %19, %c0_i32_9 : i32
    %27 = vector.broadcast %26 : i1 to vector<64x6xi1>
    %28 = vector.broadcast %27 : vector<64x6xi1> to vector<64x6xi1>
    %29 = arith.xori %25, %28 : vector<64x6xi1>
    %30 = arith.andi %29, %23 : vector<64x6xi1>
    %31 = vector.broadcast %19 : i32 to vector<64x6xi32>
    %32 = arith.addi %21, %31 : vector<64x6xi32>
    %33 = arith.select %30, %32, %21 : vector<64x6xi1>, vector<64x6xi32>
    %c15_i32 = arith.constant 15 : i32
    %34 = vector.broadcast %c15_i32 : i32 to vector<64x6xi32>
    %35 = arith.cmpi slt, %33, %34 : vector<64x6xi32>
    %cst_10 = arith.constant -3.40282347E+38 : f32
    %36 = vector.broadcast %cst_10 : f32 to vector<64x6xf32>
    %37 = arith.select %35, %13, %36 : vector<64x6xi1>, vector<64x6xf32>
    %c14_i32 = arith.constant 14 : i32
    %38 = vector.broadcast %c14_i32 : i32 to vector<64x6xi32>
    %39 = arith.cmpi slt, %33, %38 : vector<64x6xi32>
    %cst_11 = arith.constant -3.40282347E+38 : f32
    %40 = vector.broadcast %cst_11 : f32 to vector<64x6xf32>
    %41 = arith.select %39, %16, %40 : vector<64x6xi1>, vector<64x6xf32>
    %42 = arith.maximumf %37, %41 : vector<64x6xf32>
    %43 = arith.maximumf %10, %42 : vector<64x6xf32>
    %c0_12 = arith.constant 0 : index
    %c0_13 = arith.constant 0 : index
    %44 = vector.load %arg3[%c0_12, %c0_13] : memref<6x16xf32, #tpu.memory_space<vmem>>, vector<6x16xf32>
    %45 = vector.extract_strided_slice %43 {offsets = [0, 0], sizes = [16, 6], strides = [1, 1]} : vector<64x6xf32> to vector<16x6xf32>
    %cst_14 = arith.constant dense<0.000000e+00> : vector<6x6xf32>
    %46 = tpu.matmul %44, %45, %cst_14 {dimension_numbers = #tpu.dot_dimension_numbers<[1], [0], [0], [1], [0, 0, 1, 1], [], []>, precision = #tpu.contract_precision<fp32>} : vector<6x16xf32>, vector<16x6xf32>, vector<6x6xf32> -> vector<6x6xf32>
    %c0_15 = arith.constant 0 : index
    %c0_16 = arith.constant 0 : index
    %47 = vector.load %arg4[%c0_15, %c0_16] : memref<24x6xf32, #tpu.memory_space<vmem>>, vector<6x6xf32>
    tpu.vector_store %arg4[%c0_15, %c0_16], %46 {strides = array<i32>} : memref<24x6xf32, #tpu.memory_space<vmem>>, vector<6x6xf32>,
    %48 = vector.extract_strided_slice %43 {offsets = [16, 0], sizes = [16, 6], strides = [1, 1]} : vector<64x6xf32> to vector<16x6xf32>
    %cst_17 = arith.constant dense<0.000000e+00> : vector<6x6xf32>
    %49 = tpu.matmul %44, %48, %cst_17 {dimension_numbers = #tpu.dot_dimension_numbers<[1], [0], [0], [1], [0, 0, 1, 1], [], []>, precision = #tpu.contract_precision<fp32>} : vector<6x16xf32>, vector<16x6xf32>, vector<6x6xf32> -> vector<6x6xf32>
    %c6 = arith.constant 6 : index
    %c0_18 = arith.constant 0 : index
    %50 = vector.load %arg4[%c6, %c0_18] : memref<24x6xf32, #tpu.memory_space<vmem>>, vector<6x6xf32>
    tpu.vector_store %arg4[%c6, %c0_18], %49 {strides = array<i32>} : memref<24x6xf32, #tpu.memory_space<vmem>>, vector<6x6xf32>,
    %51 = vector.extract_strided_slice %43 {offsets = [32, 0], sizes = [16, 6], strides = [1, 1]} : vector<64x6xf32> to vector<16x6xf32>
    %cst_19 = arith.constant dense<0.000000e+00> : vector<6x6xf32>
    %52 = tpu.matmul %44, %51, %cst_19 {dimension_numbers = #tpu.dot_dimension_numbers<[1], [0], [0], [1], [0, 0, 1, 1], [], []>, precision = #tpu.contract_precision<fp32>} : vector<6x16xf32>, vector<16x6xf32>, vector<6x6xf32> -> vector<6x6xf32>
    %c12 = arith.constant 12 : index
    %c0_20 = arith.constant 0 : index
    %53 = vector.load %arg4[%c12, %c0_20] : memref<24x6xf32, #tpu.memory_space<vmem>>, vector<6x6xf32>
    tpu.vector_store %arg4[%c12, %c0_20], %52 {strides = array<i32>} : memref<24x6xf32, #tpu.memory_space<vmem>>, vector<6x6xf32>,
    %54 = vector.extract_strided_slice %43 {offsets = [48, 0], sizes = [16, 6], strides = [1, 1]} : vector<64x6xf32> to vector<16x6xf32>
    %cst_21 = arith.constant dense<0.000000e+00> : vector<6x6xf32>
    %55 = tpu.matmul %44, %54, %cst_21 {dimension_numbers = #tpu.dot_dimension_numbers<[1], [0], [0], [1], [0, 0, 1, 1], [], []>, precision = #tpu.contract_precision<fp32>} : vector<6x16xf32>, vector<16x6xf32>, vector<6x6xf32> -> vector<6x6xf32>
    %c18 = arith.constant 18 : index
    %c0_22 = arith.constant 0 : index
    %56 = vector.load %arg4[%c18, %c0_22] : memref<24x6xf32, #tpu.memory_space<vmem>>, vector<6x6xf32>
    tpu.vector_store %arg4[%c18, %c0_22], %55 {strides = array<i32>} : memref<24x6xf32, #tpu.memory_space<vmem>>, vector<6x6xf32>,
    return
  }
  func.func @transform_0(%arg0: i32) -> (i32, i32) {
    %c0_i32 = arith.constant 0 : i32
    %c0_i32_0 = arith.constant 0 : i32
    return %arg0, %c0_i32 : i32, i32
  }
  func.func @transform_1(%arg0: i32) -> (i32, i32) {
    %c0_i32 = arith.constant 0 : i32
    %c0_i32_0 = arith.constant 0 : i32
    %c0_i32_1 = arith.constant 0 : i32
    return %c0_i32, %c0_i32_0 : i32, i32
  }
  func.func @transform_2(%arg0: i32) -> (i32, i32) {
    %c0_i32 = arith.constant 0 : i32
    %c0_i32_0 = arith.constant 0 : i32
    %c0_i32_1 = arith.constant 0 : i32
    return %c0_i32, %c0_i32_0 : i32, i32
  }
  func.func @transform_3(%arg0: i32) -> (i32, i32) {
    %c0_i32 = arith.constant 0 : i32
    %c0_i32_0 = arith.constant 0 : i32
    return %arg0, %c0_i32 : i32, i32
  }
}

</mosaic_0001>

<llo_original>
// kernel: maxpool2d_ceil.1
$region0: #{maxpool2d_ceil.1}
  #allocation0 [shape = 'u32[]', space=smem, size = 0x4, offset = 0x4, fixed_abs, tag = 'smem constant byte address 0x4 - core index']
  #allocation1 [shape = 'u32[72,128]{1,0:T(1,128)}', space=vmem, size = 0x9000, scoped, tag = 'internal scratch']
  %s0 = inlined_call_operand.hbm [shape: f32[128,16], index: 0, kind: input, shape index: {}]
  %s1 = inlined_call_operand.hbm [shape: f32[16,6], index: 1, kind: input, shape index: {}]
  %s2 = inlined_call_operand.hbm [shape: f32[6,16], index: 2, kind: input, shape index: {}]
  %s3 = inlined_call_operand.vmem [shape: f32[48,6], index: 3, kind: output, shape index: {}]
  %s4 = sld [smem:[#allocation0]]
  $region57: #{maxpool2d_ceil.1} parent=0
    _
  %s6 = ssub.s32 1, %s4
  %s7 = scalar_select 0, %s6, %s4
  $region1: #{maxpool2d_ceil.1} parent=0
    #allocation2 [shape = 'u8[65536]{0}', space=vmem, size = 0x10000, scoped, tag = 'input window, operand 0']
    #allocation3 [shape = 's32[2]{0}', space=sflag, size = 0x8, scoped, tag = 'scoped memory for maxpool2d_ceil.1']
    #allocation4 [shape = 'u8[8192]{0}', space=vmem, size = 0x2000, scoped, tag = 'input window, operand 1, single buffered']
    #allocation5 [shape = 's32[1]{0}', space=sflag, size = 0x4, scoped, tag = 'scoped memory for maxpool2d_ceil.1']
    #allocation6 [shape = 'u8[4096]{0}', space=vmem, size = 0x1000, scoped, tag = 'input window, operand 2, single buffered']
    %8 = vsyncpa [#allocation3], 0
    %s9 = scalar_lea.sflag [#allocation3], 1
    %10 = vsyncpa %s9, 0
    %11 = vsyncpa [#allocation5], 0
    loop: start=0, step=1, limit=4
    $region2: #{maxpool2d_ceil.1} parent=1 // loop_pre_header
      _
    $region3: #{maxpool2d_ceil.1} parent=1 // loop_header
      %s13 = sphi 0, %s17
      %p14 = scmp.ge.s32.totalorder %s13, 4
      %s23 = sphi 0, %s25
      %s26 = sphi 0, %s23
      %s27 = sphi 0, %s26
      %s43 = sphi 0, %s27
      %s47 = sphi 0, %s47
      %s49 = sphi 0, %s47
      %s50 = sphi 0, %s49
      %s64 = sphi 0, %s50
      %s68 = sphi 0, %s68
      %s70 = sphi 0, %s68
      %s71 = sphi 0, %s70
      %s85 = sphi 0, %s71
      %s91 = sphi 0, %s93
      %s94 = sphi 0, %s91
      %s95 = sphi 0, %s94
      %s111 = sphi 0, %s95
    $region4: #{maxpool2d_ceil.1} parent=1 // loop_header_branch
      %16 = sbr.rel (%p14) target = $region8
    $region5: #{maxpool2d_ceil.1} parent=1 // loop_body
      %s18 = ssub.s32 %s13, 1
      %s19 = ssub.s32 %s13, 2
      %s20 = sadd.s32 %s13, 1
      %s21 = ssub.s32 %s13, %s20
      %p22 = scmp.eq.s32.totalorder %s21, 0
      %s24 = sadd.s32 %s23, 1
      %s25 = scalar_select %p22, %s23, %s24
      %p28 = pneg %p22
      %p29 = scmp.eq.s32.totalorder %s13, 1
      %p30 = por %p28, %p29
      %p31 = scmp.ne.s32.totalorder %s23, %s26
      %p32 = scmp.eq.s32.totalorder %s13, 0
      %p33 = por %p31, %p32
      %p34 = scmp.ne.s32.totalorder %s23, %s26
      %p35 = scmp.eq.s32.totalorder %s18, 1
      %p36 = por %p34, %p35
      %p37 = scmp.ne.s32.totalorder %s26, %s27
      %p38 = scmp.eq.s32.totalorder %s18, 0
      %p39 = por %p37, %p38
      %p40 = scmp.ne.s32.totalorder %s26, %s27
      %p41 = scmp.eq.s32.totalorder %s19, 1
      %p42 = por %p40, %p41
      %p44 = scmp.ne.s32.totalorder %s27, %s43
      %p45 = scmp.eq.s32.totalorder %s19, 0
      %p46 = por %p44, %p45
      %s48 = sadd.s32 %s47, 1
      %p51 = scmp.eq.s32.totalorder %s13, 1
      %p52 = scmp.ne.s32.totalorder %s47, %s49
      %p53 = scmp.eq.s32.totalorder %s13, 0
      %p54 = por %p52, %p53
      %p55 = scmp.ne.s32.totalorder %s47, %s49
      %p56 = scmp.eq.s32.totalorder %s18, 1
      %p57 = por %p55, %p56
      %p58 = scmp.ne.s32.totalorder %s49, %s50
      %p59 = scmp.eq.s32.totalorder %s18, 0
      %p60 = por %p58, %p59
      %p61 = scmp.ne.s32.totalorder %s49, %s50
      %p62 = scmp.eq.s32.totalorder %s19, 1
      %p63 = por %p61, %p62
      %p65 = scmp.ne.s32.totalorder %s50, %s64
      %p66 = scmp.eq.s32.totalorder %s19, 0
      %p67 = por %p65, %p66
      %s69 = sadd.s32 %s68, 1
      %p72 = scmp.eq.s32.totalorder %s13, 1
      %p73 = scmp.ne.s32.totalorder %s68, %s70
      %p74 = scmp.eq.s32.totalorder %s13, 0
      %p75 = por %p73, %p74
      %p76 = scmp.ne.s32.totalorder %s68, %s70
      %p77 = scmp.eq.s32.totalorder %s18, 1
      %p78 = por %p76, %p77
      %p79 = scmp.ne.s32.totalorder %s70, %s71
      %p80 = scmp.eq.s32.totalorder %s18, 0
      %p81 = por %p79, %p80
      %p82 = scmp.ne.s32.totalorder %s70, %s71
      %p83 = scmp.eq.s32.totalorder %s19, 1
      %p84 = por %p82, %p83
      %p86 = scmp.ne.s32.totalorder %s71, %s85
      %p87 = scmp.eq.s32.totalorder %s19, 0
      %p88 = por %p86, %p87
      %s89 = ssub.s32 %s13, %s20
      %p90 = scmp.eq.s32.totalorder %s89, 0
      %s92 = sadd.s32 %s91, 1
      %s93 = scalar_select %p90, %s91, %s92
      %p96 = pneg %p90
      %p97 = scmp.eq.s32.totalorder %s13, 1
      %p98 = por %p96, %p97
      %p99 = scmp.ne.s32.totalorder %s91, %s94
      %p100 = scmp.eq.s32.totalorder %s13, 0
      %p101 = por %p99, %p100
      %p102 = scmp.ne.s32.totalorder %s91, %s94
      %p103 = scmp.eq.s32.totalorder %s18, 1
      %p104 = por %p102, %p103
      %p105 = scmp.ne.s32.totalorder %s94, %s95
      %p106 = scmp.eq.s32.totalorder %s18, 0
      %p107 = por %p105, %p106
      %p108 = scmp.ne.s32.totalorder %s94, %s95
      %p109 = scmp.eq.s32.totalorder %s19, 1
      %p110 = por %p108, %p109
      %p112 = scmp.ne.s32.totalorder %s95, %s111
      %p113 = scmp.eq.s32.totalorder %s19, 0
      %p114 = por %p112, %p113
      %p115 = scmp.le.s32.totalorder 1, %s13
      %p116 = scmp.lt.s32.totalorder %s13, 3
      %p117 = pnand %p115, %p116
      %p118 = pneg %p117
      // Predicated region
      $region9: #{maxpool2d_ceil.1} parent=5 // pred_check
        _
      $region10: #{maxpool2d_ceil.1} parent=5 // pred_check_branch
        %120 = sbr.rel (%p117) target = $region12
      $region11: #{maxpool2d_ceil.1} parent=5 // pred_region
        %s121 = ssub.s32 %s13, 1
        // Predicated region
        $region13: #{maxpool2d_ceil.1} parent=11 // pred_check
          %p122 = pneg %p60
        $region14: #{maxpool2d_ceil.1} parent=11 // pred_check_branch
          %124 = sbr.rel (%p122) target = $region16
        $region15: #{maxpool2d_ceil.1} parent=11 // pred_region
          %126 = vsyncadd [#allocation5], 0
          %s127 = sshll.u32 %s1, 4
          %s128 = int_to_ptr.hbm [resolvable:$true] %s127
          %s129 = sshll.u32 [#allocation4], 4
          %s130 = int_to_ptr.vmem [resolvable:$true] %s129
          %135 = dma.hbm_to_vmem [thread:$0]  %s128, 256, %s130, [#allocation5], 128, 128, 8
        $region16: #{maxpool2d_ceil.1} parent=11 // pred_fallthru
          _
        // Predicated region
        $region17: #{maxpool2d_ceil.1} parent=11 // pred_check
          %p136 = pneg %p81
        $region18: #{maxpool2d_ceil.1} parent=11 // pred_check_branch
          %138 = sbr.rel (%p136) target = $region20
        $region19: #{maxpool2d_ceil.1} parent=11 // pred_region
          %140 = vsyncadd [#allocation5], 0
          %s142 = sshll.u32 %s2, 4
          %s143 = int_to_ptr.hbm [resolvable:$true] %s142
          %s144 = sshll.u32 [#allocation6], 4
          %s145 = int_to_ptr.vmem [resolvable:$true] %s144
          %147 = dma.hbm_to_vmem [thread:$0]  %s143, 128, %s145, [#allocation5]
        $region20: #{maxpool2d_ceil.1} parent=11 // pred_fallthru
          _
      $region12: #{maxpool2d_ceil.1} parent=5 // pred_fallthru
        _
      %p148 = scmp.lt.s32.totalorder %s13, 2
      // Predicated region
      $region21: #{maxpool2d_ceil.1} parent=5 // pred_check
        %p149 = pneg %p148
      $region22: #{maxpool2d_ceil.1} parent=5 // pred_check_branch
        %151 = sbr.rel (%p149) target = $region24
      $region23: #{maxpool2d_ceil.1} parent=5 // pred_region
        // Predicated region
        $region25: #{maxpool2d_ceil.1} parent=23 // pred_check
          %p152 = pneg %p33
        $region26: #{maxpool2d_ceil.1} parent=23 // pred_check_branch
          %154 = sbr.rel (%p152) target = $region28
        $region27: #{maxpool2d_ceil.1} parent=23 // pred_region
          %s155 = sand.u32 %s23, 1
          %s156 = scalar_lea.sflag [#allocation3], %s155
          %s157 = sand.u32 %s23, 1
          %s158 = smul.addr %s157, 64
          %s159 = scalar_lea.vmem [#allocation2], %s158
          %s160 = smul.u32 8, %s13
          %162 = vsyncadd %s156, 0
          %s163 = smul.addr %s160, 8
          %s164 = scalar_lea.hbm %s0, %s163
          %s165 = sshll.u32 %s164, 4
          %s166 = int_to_ptr.hbm [resolvable:$true] %s165
          %s167 = sshll.u32 %s159, 4
          %s168 = int_to_ptr.vmem [resolvable:$true] %s167
          %173 = dma.hbm_to_vmem [thread:$0]  %s166, 1024, %s168, %s156, 128, 128, 8
        $region28: #{maxpool2d_ceil.1} parent=23 // pred_fallthru
          _
      $region24: #{maxpool2d_ceil.1} parent=5 // pred_fallthru
        _
      %p174 = scmp.le.s32.totalorder 1, %s13
      %p175 = scmp.lt.s32.totalorder %s13, 3
      %p176 = pnand %p174, %p175
      %p177 = pneg %p176
      // Predicated region
      $region29: #{maxpool2d_ceil.1} parent=5 // pred_check
        _
      $region30: #{maxpool2d_ceil.1} parent=5 // pred_check_branch
        %179 = sbr.rel (%p176) target = $region32
      $region31: #{maxpool2d_ceil.1} parent=5 // pred_region
        %s180 = ssub.s32 %s13, 1
        %s181 = sand.u32 %s26, 1
        %s182 = scalar_lea.sflag [#allocation3], %s181
        %s183 = sand.u32 %s26, 1
        %s184 = smul.addr %s183, 64
        %s185 = scalar_lea.vmem [#allocation2], %s184
        // Predicated region
        $region33: #{maxpool2d_ceil.1} parent=31 // pred_check
          %p186 = pneg %p39
        $region34: #{maxpool2d_ceil.1} parent=31 // pred_check_branch
          %188 = sbr.rel (%p186) target = $region36
        $region35: #{maxpool2d_ceil.1} parent=31 // pred_region
          %190 = dma.done %s182, 1024
        $region36: #{maxpool2d_ceil.1} parent=31 // pred_fallthru
          _
        // Predicated region
        $region37: #{maxpool2d_ceil.1} parent=31 // pred_check
          %p191 = pneg %p60
        $region38: #{maxpool2d_ceil.1} parent=31 // pred_check_branch
          %193 = sbr.rel (%p191) target = $region40
        $region39: #{maxpool2d_ceil.1} parent=31 // pred_region
          %195 = dma.done [#allocation5], 256
        $region40: #{maxpool2d_ceil.1} parent=31 // pred_fallthru
          _
        // Predicated region
        $region41: #{maxpool2d_ceil.1} parent=31 // pred_check
          %p196 = pneg %p81
        $region42: #{maxpool2d_ceil.1} parent=31 // pred_check_branch
          %198 = sbr.rel (%p196) target = $region44
        $region43: #{maxpool2d_ceil.1} parent=31 // pred_region
          %200 = dma.done [#allocation5], 128
        $region44: #{maxpool2d_ceil.1} parent=31 // pred_fallthru
          _
        %s201 = sand.u32 %s26, 1
        %s202 = scalar_lea.sflag [#allocation3], %s201
        %s203 = sand.u32 %s26, 1
        %s204 = smul.addr %s203, 64
        %s205 = scalar_lea.vmem [#allocation2], %s204
        %p206 = pneg %p39
        %p207 = pneg %p36
        %p208 = pneg %p60
        %p209 = pneg %p57
        %p210 = pneg %p81
        %p211 = pneg %p78
        %p212 = pneg %p107
        %p213 = pneg %p104
        %s214 = smul.u32 3, %s18
        %p215 = scmp.lt.s32.totalorder %s214, 5
        %s216 = scalar_select %p215, %s214, 5
        %s217 = smul.addr %s216, 8
        %s218 = scalar_lea.vmem %s3, %s217
        %s219 = smul.u32 8, %s18
        %s220 = smul.u32 3, %s18
        %p221 = scmp.lt.s32.totalorder %s220, 5
        %s222 = scalar_select %p221, %s220, 5
        %s223 = smul.addr %s222, 8
        %s224 = scalar_lea.vmem %s3, %s223
        %s225 = smul.u32 3, %s18
        %v226 = vld [vmem:[%s185] sm:$0xff]
        %v227 = vld [vmem:[%s185 + $0x8] sm:$0xff]
        %v228 = vld [vmem:[%s185 + $0x10] sm:$0xff]
        %v229 = vld [vmem:[%s185 + $0x18] sm:$0xff]
        %v230 = vld [vmem:[%s185 + $0x20] sm:$0xff]
        %v231 = vld [vmem:[%s185 + $0x28] sm:$0xff]
        %v232 = vld [vmem:[%s185 + $0x30] sm:$0xff]
        %v233 = vld [vmem:[%s185 + $0x38] sm:$0xff]
        %242 = vrot.lane.b32.xlu0 %v226, 127
        %v243 = vpop.permute.xlu0 %242
        %244 = vrot.lane.b32.xlu0 %v227, 127
        %v245 = vpop.permute.xlu0 %244
        %246 = vrot.lane.b32.xlu0 %v228, 127
        %v247 = vpop.permute.xlu0 %246
        %248 = vrot.lane.b32.xlu0 %v229, 127
        %v249 = vpop.permute.xlu0 %248
        %250 = vrot.lane.b32.xlu0 %v230, 127
        %v251 = vpop.permute.xlu0 %250
        %252 = vrot.lane.b32.xlu0 %v231, 127
        %v253 = vpop.permute.xlu0 %252
        %254 = vrot.lane.b32.xlu0 %v232, 127
        %v255 = vpop.permute.xlu0 %254
        %256 = vrot.lane.b32.xlu0 %v233, 127
        %v257 = vpop.permute.xlu0 %256
        %vm266 = vcmask 121856
        %v267 = vsel %vm266, %v243, -3.4028235e+38
        %v268 = vsel %vm266, %v245, -3.4028235e+38
        %v269 = vsel %vm266, %v247, -3.4028235e+38
        %v270 = vsel %vm266, %v249, -3.4028235e+38
        %v271 = vsel %vm266, %v251, -3.4028235e+38
        %v272 = vsel %vm266, %v253, -3.4028235e+38
        %v273 = vsel %vm266, %v255, -3.4028235e+38
        %v274 = vsel %vm266, %v257, -3.4028235e+38
        %275 = vrot.lane.b32.xlu0 %v226, 126
        %v276 = vpop.permute.xlu0 %275
        %277 = vrot.lane.b32.xlu0 %v227, 126
        %v278 = vpop.permute.xlu0 %277
        %279 = vrot.lane.b32.xlu0 %v228, 126
        %v280 = vpop.permute.xlu0 %279
        %281 = vrot.lane.b32.xlu0 %v229, 126
        %v282 = vpop.permute.xlu0 %281
        %283 = vrot.lane.b32.xlu0 %v230, 126
        %v284 = vpop.permute.xlu0 %283
        %285 = vrot.lane.b32.xlu0 %v231, 126
        %v286 = vpop.permute.xlu0 %285
        %287 = vrot.lane.b32.xlu0 %v232, 126
        %v288 = vpop.permute.xlu0 %287
        %289 = vrot.lane.b32.xlu0 %v233, 126
        %v290 = vpop.permute.xlu0 %289
        %vm299 = vcmask 113664
        %v300 = vsel %vm299, %v276, -3.4028235e+38
        %v301 = vsel %vm299, %v278, -3.4028235e+38
        %v302 = vsel %vm299, %v280, -3.4028235e+38
        %v303 = vsel %vm299, %v282, -3.4028235e+38
        %v304 = vsel %vm299, %v284, -3.4028235e+38
        %v305 = vsel %vm299, %v286, -3.4028235e+38
        %v306 = vsel %vm299, %v288, -3.4028235e+38
        %v307 = vsel %vm299, %v290, -3.4028235e+38
        %v308 = vmax.f32 %v267, %v300
        %v309 = vmax.f32 %v268, %v301
        %v310 = vmax.f32 %v269, %v302
        %v311 = vmax.f32 %v270, %v303
        %v312 = vmax.f32 %v271, %v304
        %v313 = vmax.f32 %v272, %v305
        %v314 = vmax.f32 %v273, %v306
        %v315 = vmax.f32 %v274, %v307
        %v316 = vmax.f32 %v226, %v308
        %v317 = vmax.f32 %v227, %v309
        %v318 = vmax.f32 %v228, %v310
        %v319 = vmax.f32 %v229, %v311
        %v320 = vmax.f32 %v230, %v312
        %v321 = vmax.f32 %v231, %v313
        %v322 = vmax.f32 %v232, %v314
        %v323 = vmax.f32 %v233, %v315
        %v324 = vld [vmem:[#allocation4] sm:$0xff]
        %v325 = vld [vmem:[#allocation4 + $0x8] sm:$0xff]
        %vm326 = vcmask 130048
        %v328 = vsel %vm326, %v316, 0
        %v331 = vsel %vm326, %v317, 0
        %v334 = vsel %vm326, %v318, 0
        %v337 = vsel %vm326, %v319, 0
        %v340 = vsel %vm326, %v320, 0
        %v343 = vsel %vm326, %v321, 0
        %v346 = vsel %vm326, %v322, 0
        %v349 = vsel %vm326, %v323, 0
        %351 = vmatpush.msra.mxu0 0.0
        %352 = vmatpush.msra.mxu0 0.0
        %353 = vmatpush.msra.mxu0 0.0
        %354 = vmatpush.msra.mxu0 0.0
        %355 = vmatpush.msra.mxu0 0.0
        %356 = vmatpush.msra.mxu0 0.0
        %357 = vmatpush.msra.mxu0 0.0
        %358 = vmatpush.msra.mxu0 0.0
        %359 = vmatpush.msra.mxu0 0.0
        %360 = vmatpush.msra.mxu0 0.0
        %361 = vmatpush.msra.mxu0 0.0
        %362 = vmatpush.msra.mxu0 0.0
        %363 = vmatpush.msra.mxu0 0.0
        %364 = vmatpush.msra.mxu0 0.0
        %v365 = vand.u32 %v325, 4294901760
        %366 = vmatpush.msra.mxu0 %v365
        %v367 = vand.u32 %v324, 4294901760
        %368 = vmatpush.msra.mxu0 %v367
        %v369 = vand.u32 %v328, 4294901760
        %v370 = vsub.f32 %v328, %v369
        %v371 = vand.u32 %v370, 4294901760
        %v372 = vsub.f32 %v370, %v371
        %v373 = vand.u32 %v372, 4294901760
        %374 = vmatmul.f32.gmra.mxu0 %v373
        %v375 = vpop.f32.mrf.mxu0
        %v376 = vadd.f32 0.0, %v375
        %v377 = vand.u32 %v331, 4294901760
        %v378 = vsub.f32 %v331, %v377
        %v379 = vand.u32 %v378, 4294901760
        %v380 = vsub.f32 %v378, %v379
        %v381 = vand.u32 %v380, 4294901760
        %382 = vmatmul.f32.gmra.mxu0 %v381
        %v383 = vpop.f32.mrf.mxu0
        %v384 = vadd.f32 0.0, %v383
        %v385 = vand.u32 %v334, 4294901760
        %v386 = vsub.f32 %v334, %v385
        %v387 = vand.u32 %v386, 4294901760
        %v388 = vsub.f32 %v386, %v387
        %v389 = vand.u32 %v388, 4294901760
        %390 = vmatmul.f32.gmra.mxu0 %v389
        %v391 = vpop.f32.mrf.mxu0
        %v392 = vadd.f32 0.0, %v391
        %v393 = vand.u32 %v337, 4294901760
        %v394 = vsub.f32 %v337, %v393
        %v395 = vand.u32 %v394, 4294901760
        %v396 = vsub.f32 %v394, %v395
        %v397 = vand.u32 %v396, 4294901760
        %398 = vmatmul.f32.gmra.mxu0 %v397
        %v399 = vpop.f32.mrf.mxu0
        %v400 = vadd.f32 0.0, %v399
        %v401 = vand.u32 %v340, 4294901760
        %v402 = vsub.f32 %v340, %v401
        %v403 = vand.u32 %v402, 4294901760
        %v404 = vsub.f32 %v402, %v403
        %v405 = vand.u32 %v404, 4294901760
        %406 = vmatmul.f32.gmra.mxu0 %v405
        %v407 = vpop.f32.mrf.mxu0
        %v408 = vadd.f32 0.0, %v407
        %v409 = vand.u32 %v343, 4294901760
        %v410 = vsub.f32 %v343, %v409
        %v411 = vand.u32 %v410, 4294901760
        %v412 = vsub.f32 %v410, %v411
        %v413 = vand.u32 %v412, 4294901760
        %414 = vmatmul.f32.gmra.mxu0 %v413
        %v415 = vpop.f32.mrf.mxu0
        %v416 = vadd.f32 0.0, %v415
        %v417 = vand.u32 %v346, 4294901760
        %v418 = vsub.f32 %v346, %v417
        %v419 = vand.u32 %v418, 4294901760
        %v420 = vsub.f32 %v418, %v419
        %v421 = vand.u32 %v420, 4294901760
        %422 = vmatmul.f32.gmra.mxu0 %v421
        %v423 = vpop.f32.mrf.mxu0
        %v424 = vadd.f32 0.0, %v423
        %v425 = vand.u32 %v349, 4294901760
        %v426 = vsub.f32 %v349, %v425
        %v427 = vand.u32 %v426, 4294901760
        %v428 = vsub.f32 %v426, %v427
        %v429 = vand.u32 %v428, 4294901760
        %430 = vmatmul.f32.gmra.mxu0 %v429
        %v431 = vpop.f32.mrf.mxu0
        %v432 = vadd.f32 0.0, %v431
        %433 = vdwg.mxu0
        %434 = vmatpush.msra.mxu0 0.0
        %435 = vmatpush.msra.mxu0 0.0
        %436 = vmatpush.msra.mxu0 0.0
        %437 = vmatpush.msra.mxu0 0.0
        %438 = vmatpush.msra.mxu0 0.0
        %439 = vmatpush.msra.mxu0 0.0
        %440 = vmatpush.msra.mxu0 0.0
        %441 = vmatpush.msra.mxu0 0.0
        %442 = vmatpush.msra.mxu0 0.0
        %443 = vmatpush.msra.mxu0 0.0
        %444 = vmatpush.msra.mxu0 0.0
        %445 = vmatpush.msra.mxu0 0.0
        %446 = vmatpush.msra.mxu0 0.0
        %447 = vmatpush.msra.mxu0 0.0
        %v448 = vand.u32 %v325, 4294901760
        %v449 = vsub.f32 %v325, %v448
        %v450 = vand.u32 %v449, 4294901760
        %v451 = vsub.f32 %v449, %v450
        %v452 = vand.u32 %v451, 4294901760
        %453 = vmatpush.msra.mxu0 %v452
        %v454 = vand.u32 %v324, 4294901760
        %v455 = vsub.f32 %v324, %v454
        %v456 = vand.u32 %v455, 4294901760
        %v457 = vsub.f32 %v455, %v456
        %v458 = vand.u32 %v457, 4294901760
        %459 = vmatpush.msra.mxu0 %v458
        %v460 = vand.u32 %v328, 4294901760
        %461 = vmatmul.f32.gmra.mxu0 %v460
        %v462 = vpop.f32.mrf.mxu0
        %v463 = vadd.f32 %v376, %v462
        %v464 = vand.u32 %v331, 4294901760
        %465 = vmatmul.f32.gmra.mxu0 %v464
        %v466 = vpop.f32.mrf.mxu0
        %v467 = vadd.f32 %v384, %v466
        %v468 = vand.u32 %v334, 4294901760
        %469 = vmatmul.f32.gmra.mxu0 %v468
        %v470 = vpop.f32.mrf.mxu0
        %v471 = vadd.f32 %v392, %v470
        %v472 = vand.u32 %v337, 4294901760
        %473 = vmatmul.f32.gmra.mxu0 %v472
        %v474 = vpop.f32.mrf.mxu0
        %v475 = vadd.f32 %v400, %v474
        %v476 = vand.u32 %v340, 4294901760
        %477 = vmatmul.f32.gmra.mxu0 %v476
        %v478 = vpop.f32.mrf.mxu0
        %v479 = vadd.f32 %v408, %v478
        %v480 = vand.u32 %v343, 4294901760
        %481 = vmatmul.f32.gmra.mxu0 %v480
        %v482 = vpop.f32.mrf.mxu0
        %v483 = vadd.f32 %v416, %v482
        %v484 = vand.u32 %v346, 4294901760
        %485 = vmatmul.f32.gmra.mxu0 %v484
        %v486 = vpop.f32.mrf.mxu0
        %v487 = vadd.f32 %v424, %v486
        %v488 = vand.u32 %v349, 4294901760
        %489 = vmatmul.f32.gmra.mxu0 %v488
        %v490 = vpop.f32.mrf.mxu0
        %v491 = vadd.f32 %v432, %v490
        %492 = vdwg.mxu0
        %493 = vmatpush.msra.mxu0 0.0
        %494 = vmatpush.msra.mxu0 0.0
        %495 = vmatpush.msra.mxu0 0.0
        %496 = vmatpush.msra.mxu0 0.0
        %497 = vmatpush.msra.mxu0 0.0
        %498 = vmatpush.msra.mxu0 0.0
        %499 = vmatpush.msra.mxu0 0.0
        %500 = vmatpush.msra.mxu0 0.0
        %501 = vmatpush.msra.mxu0 0.0
        %502 = vmatpush.msra.mxu0 0.0
        %503 = vmatpush.msra.mxu0 0.0
        %504 = vmatpush.msra.mxu0 0.0
        %505 = vmatpush.msra.mxu0 0.0
        %506 = vmatpush.msra.mxu0 0.0
        %v507 = vand.u32 %v325, 4294901760
        %v508 = vsub.f32 %v325, %v507
        %509 = vmatpush.msra.mxu0 %v508
        %v510 = vand.u32 %v324, 4294901760
        %v511 = vsub.f32 %v324, %v510
        %512 = vmatpush.msra.mxu0 %v511
        %v513 = vand.u32 %v328, 4294901760
        %v514 = vsub.f32 %v328, %v513
        %515 = vmatmul.f32.gmra.mxu0 %v514
        %v516 = vpop.f32.mrf.mxu0
        %v517 = vadd.f32 %v463, %v516
        %v518 = vand.u32 %v331, 4294901760
        %v519 = vsub.f32 %v331, %v518
        %520 = vmatmul.f32.gmra.mxu0 %v519
        %v521 = vpop.f32.mrf.mxu0
        %v522 = vadd.f32 %v467, %v521
        %v523 = vand.u32 %v334, 4294901760
        %v524 = vsub.f32 %v334, %v523
        %525 = vmatmul.f32.gmra.mxu0 %v524
        %v526 = vpop.f32.mrf.mxu0
        %v527 = vadd.f32 %v471, %v526
        %v528 = vand.u32 %v337, 4294901760
        %v529 = vsub.f32 %v337, %v528
        %530 = vmatmul.f32.gmra.mxu0 %v529
        %v531 = vpop.f32.mrf.mxu0
        %v532 = vadd.f32 %v475, %v531
        %v533 = vand.u32 %v340, 4294901760
        %v534 = vsub.f32 %v340, %v533
        %535 = vmatmul.f32.gmra.mxu0 %v534
        %v536 = vpop.f32.mrf.mxu0
        %v537 = vadd.f32 %v479, %v536
        %v538 = vand.u32 %v343, 4294901760
        %v539 = vsub.f32 %v343, %v538
        %540 = vmatmul.f32.gmra.mxu0 %v539
        %v541 = vpop.f32.mrf.mxu0
        %v542 = vadd.f32 %v483, %v541
        %v543 = vand.u32 %v346, 4294901760
        %v544 = vsub.f32 %v346, %v543
        %545 = vmatmul.f32.gmra.mxu0 %v544
        %v546 = vpop.f32.mrf.mxu0
        %v547 = vadd.f32 %v487, %v546
        %v548 = vand.u32 %v349, 4294901760
        %v549 = vsub.f32 %v349, %v548
        %550 = vmatmul.f32.gmra.mxu0 %v549
        %v551 = vpop.f32.mrf.mxu0
        %v552 = vadd.f32 %v491, %v551
        %553 = vdwg.mxu0
        %554 = vmatpush.msra.mxu0 0.0
        %555 = vmatpush.msra.mxu0 0.0
        %556 = vmatpush.msra.mxu0 0.0
        %557 = vmatpush.msra.mxu0 0.0
        %558 = vmatpush.msra.mxu0 0.0
        %559 = vmatpush.msra.mxu0 0.0
        %560 = vmatpush.msra.mxu0 0.0
        %561 = vmatpush.msra.mxu0 0.0
        %562 = vmatpush.msra.mxu0 0.0
        %563 = vmatpush.msra.mxu0 0.0
        %564 = vmatpush.msra.mxu0 0.0
        %565 = vmatpush.msra.mxu0 0.0
        %566 = vmatpush.msra.mxu0 0.0
        %567 = vmatpush.msra.mxu0 0.0
        %v568 = vand.u32 %v325, 4294901760
        %569 = vmatpush.msra.mxu0 %v568
        %v570 = vand.u32 %v324, 4294901760
        %571 = vmatpush.msra.mxu0 %v570
        %v572 = vand.u32 %v328, 4294901760
        %v573 = vsub.f32 %v328, %v572
        %v574 = vand.u32 %v573, 4294901760
        %575 = vmatmul.f32.gmra.mxu0 %v574
        %v576 = vpop.f32.mrf.mxu0
        %v577 = vadd.f32 %v517, %v576
        %v578 = vand.u32 %v331, 4294901760
        %v579 = vsub.f32 %v331, %v578
        %v580 = vand.u32 %v579, 4294901760
        %581 = vmatmul.f32.gmra.mxu0 %v580
        %v582 = vpop.f32.mrf.mxu0
        %v583 = vadd.f32 %v522, %v582
        %v584 = vand.u32 %v334, 4294901760
        %v585 = vsub.f32 %v334, %v584
        %v586 = vand.u32 %v585, 4294901760
        %587 = vmatmul.f32.gmra.mxu0 %v586
        %v588 = vpop.f32.mrf.mxu0
        %v589 = vadd.f32 %v527, %v588
        %v590 = vand.u32 %v337, 4294901760
        %v591 = vsub.f32 %v337, %v590
        %v592 = vand.u32 %v591, 4294901760
        %593 = vmatmul.f32.gmra.mxu0 %v592
        %v594 = vpop.f32.mrf.mxu0
        %v595 = vadd.f32 %v532, %v594
        %v596 = vand.u32 %v340, 4294901760
        %v597 = vsub.f32 %v340, %v596
        %v598 = vand.u32 %v597, 4294901760
        %599 = vmatmul.f32.gmra.mxu0 %v598
        %v600 = vpop.f32.mrf.mxu0
        %v601 = vadd.f32 %v537, %v600
        %v602 = vand.u32 %v343, 4294901760
        %v603 = vsub.f32 %v343, %v602
        %v604 = vand.u32 %v603, 4294901760
        %605 = vmatmul.f32.gmra.mxu0 %v604
        %v606 = vpop.f32.mrf.mxu0
        %v607 = vadd.f32 %v542, %v606
        %v608 = vand.u32 %v346, 4294901760
        %v609 = vsub.f32 %v346, %v608
        %v610 = vand.u32 %v609, 4294901760
        %611 = vmatmul.f32.gmra.mxu0 %v610
        %v612 = vpop.f32.mrf.mxu0
        %v613 = vadd.f32 %v547, %v612
        %v614 = vand.u32 %v349, 4294901760
        %v615 = vsub.f32 %v349, %v614
        %v616 = vand.u32 %v615, 4294901760
        %617 = vmatmul.f32.gmra.mxu0 %v616
        %v618 = vpop.f32.mrf.mxu0
        %v619 = vadd.f32 %v552, %v618
        %620 = vdwg.mxu0
        %621 = vmatpush.msra.mxu0 0.0
        %622 = vmatpush.msra.mxu0 0.0
        %623 = vmatpush.msra.mxu0 0.0
        %624 = vmatpush.msra.mxu0 0.0
        %625 = vmatpush.msra.mxu0 0.0
        %626 = vmatpush.msra.mxu0 0.0
        %627 = vmatpush.msra.mxu0 0.0
        %628 = vmatpush.msra.mxu0 0.0
        %629 = vmatpush.msra.mxu0 0.0
        %630 = vmatpush.msra.mxu0 0.0
        %631 = vmatpush.msra.mxu0 0.0
        %632 = vmatpush.msra.mxu0 0.0
        %633 = vmatpush.msra.mxu0 0.0
        %634 = vmatpush.msra.mxu0 0.0
        %v635 = vand.u32 %v325, 4294901760
        %v636 = vsub.f32 %v325, %v635
        %v637 = vand.u32 %v636, 4294901760
        %638 = vmatpush.msra.mxu0 %v637
        %v639 = vand.u32 %v324, 4294901760
        %v640 = vsub.f32 %v324, %v639
        %v641 = vand.u32 %v640, 4294901760
        %642 = vmatpush.msra.mxu0 %v641
        %v643 = vand.u32 %v328, 4294901760
        %644 = vmatmul.f32.gmra.mxu0 %v643
        %v645 = vpop.f32.mrf.mxu0
        %v646 = vadd.f32 %v577, %v645
        %v647 = vand.u32 %v331, 4294901760
        %648 = vmatmul.f32.gmra.mxu0 %v647
        %v649 = vpop.f32.mrf.mxu0
        %v650 = vadd.f32 %v583, %v649
        %v651 = vand.u32 %v334, 4294901760
        %652 = vmatmul.f32.gmra.mxu0 %v651
        %v653 = vpop.f32.mrf.mxu0
        %v654 = vadd.f32 %v589, %v653
        %v655 = vand.u32 %v337, 4294901760
        %656 = vmatmul.f32.gmra.mxu0 %v655
        %v657 = vpop.f32.mrf.mxu0
        %v658 = vadd.f32 %v595, %v657
        %v659 = vand.u32 %v340, 4294901760
        %660 = vmatmul.f32.gmra.mxu0 %v659
        %v661 = vpop.f32.mrf.mxu0
        %v662 = vadd.f32 %v601, %v661
        %v663 = vand.u32 %v343, 4294901760
        %664 = vmatmul.f32.gmra.mxu0 %v663
        %v665 = vpop.f32.mrf.mxu0
        %v666 = vadd.f32 %v607, %v665
        %v667 = vand.u32 %v346, 4294901760
        %668 = vmatmul.f32.gmra.mxu0 %v667
        %v669 = vpop.f32.mrf.mxu0
        %v670 = vadd.f32 %v613, %v669
        %v671 = vand.u32 %v349, 4294901760
        %672 = vmatmul.f32.gmra.mxu0 %v671
        %v673 = vpop.f32.mrf.mxu0
        %v674 = vadd.f32 %v619, %v673
        %675 = vdwg.mxu0
        %676 = vmatpush.msra.mxu0 0.0
        %677 = vmatpush.msra.mxu0 0.0
        %678 = vmatpush.msra.mxu0 0.0
        %679 = vmatpush.msra.mxu0 0.0
        %680 = vmatpush.msra.mxu0 0.0
        %681 = vmatpush.msra.mxu0 0.0
        %682 = vmatpush.msra.mxu0 0.0
        %683 = vmatpush.msra.mxu0 0.0
        %684 = vmatpush.msra.mxu0 0.0
        %685 = vmatpush.msra.mxu0 0.0
        %686 = vmatpush.msra.mxu0 0.0
        %687 = vmatpush.msra.mxu0 0.0
        %688 = vmatpush.msra.mxu0 0.0
        %689 = vmatpush.msra.mxu0 0.0
        %v690 = vand.u32 %v325, 4294901760
        %691 = vmatpush.msra.mxu0 %v690
        %v692 = vand.u32 %v324, 4294901760
        %693 = vmatpush.msra.mxu0 %v692
        %v694 = vand.u32 %v328, 4294901760
        %695 = vmatmul.f32.gmra.mxu0 %v694
        %v696 = vpop.f32.mrf.mxu0
        %v697 = vadd.f32 %v646, %v696
        %v698 = vand.u32 %v331, 4294901760
        %699 = vmatmul.f32.gmra.mxu0 %v698
        %v700 = vpop.f32.mrf.mxu0
        %v701 = vadd.f32 %v650, %v700
        %v702 = vand.u32 %v334, 4294901760
        %703 = vmatmul.f32.gmra.mxu0 %v702
        %v704 = vpop.f32.mrf.mxu0
        %v705 = vadd.f32 %v654, %v704
        %v706 = vand.u32 %v337, 4294901760
        %707 = vmatmul.f32.gmra.mxu0 %v706
        %v708 = vpop.f32.mrf.mxu0
        %v709 = vadd.f32 %v658, %v708
        %v710 = vand.u32 %v340, 4294901760
        %711 = vmatmul.f32.gmra.mxu0 %v710
        %v712 = vpop.f32.mrf.mxu0
        %v713 = vadd.f32 %v662, %v712
        %v714 = vand.u32 %v343, 4294901760
        %715 = vmatmul.f32.gmra.mxu0 %v714
        %v716 = vpop.f32.mrf.mxu0
        %v717 = vadd.f32 %v666, %v716
        %v718 = vand.u32 %v346, 4294901760
        %719 = vmatmul.f32.gmra.mxu0 %v718
        %v720 = vpop.f32.mrf.mxu0
        %v721 = vadd.f32 %v670, %v720
        %v722 = vand.u32 %v349, 4294901760
        %723 = vmatmul.f32.gmra.mxu0 %v722
        %v724 = vpop.f32.mrf.mxu0
        %v725 = vadd.f32 %v674, %v724
        %726 = vdwg.mxu0
        %vm735 = vcmask 1046528
        %v736 = vrot.slane %v697, 1
        %v737 = vrot.slane %v701, 1
        %v738 = vsel %vm735, %v736, %v737
        %v739 = vrot.slane %v705, 1
        %v740 = vsel %vm735, %v737, %v739
        %v741 = vrot.slane %v709, 1
        %v742 = vsel %vm735, %v739, %v741
        %v743 = vrot.slane %v713, 1
        %v744 = vsel %vm735, %v741, %v743
        %v745 = vrot.slane %v717, 1
        %v746 = vsel %vm735, %v743, %v745
        %v747 = vrot.slane %v721, 1
        %v748 = vsel %vm735, %v745, %v747
        %v749 = vrot.slane %v725, 1
        %v750 = vsel %vm735, %v747, %v749
        %v759 = vsel %vm735, %v749, -3.4028235e+38
        %vm760 = vcmask 1045504
        %v761 = vrot.slane %v697, 2
        %v762 = vrot.slane %v701, 2
        %v763 = vsel %vm760, %v761, %v762
        %v764 = vrot.slane %v705, 2
        %v765 = vsel %vm760, %v762, %v764
        %v766 = vrot.slane %v709, 2
        %v767 = vsel %vm760, %v764, %v766
        %v768 = vrot.slane %v713, 2
        %v769 = vsel %vm760, %v766, %v768
        %v770 = vrot.slane %v717, 2
        %v771 = vsel %vm760, %v768, %v770
        %v772 = vrot.slane %v721, 2
        %v773 = vsel %vm760, %v770, %v772
        %v774 = vrot.slane %v725, 2
        %v775 = vsel %vm760, %v772, %v774
        %v784 = vsel %vm760, %v774, -3.4028235e+38
        %v785 = vlaneseq
        %v786 = vshrl.u32 %v785, 7
        %v787 = vadd.s32 %v786, 8
        %v788 = vadd.s32 %v786, 16
        %v789 = vadd.s32 %v786, 24
        %v790 = vadd.s32 %v786, 32
        %v791 = vadd.s32 %v786, 40
        %v792 = vadd.s32 %v786, 48
        %v793 = vadd.s32 %v786, 56
        %vm794 = vcmp.lt.s32.totalorder %v786, 0
        %v795 = vsub.s32 0, %v786
        %v796 = vsel %vm794, %v795, %v786
        %v797 = vshrl.u32 %v796, 4
        %v798 = vand.u32 %v796, 15
        %v799 = vsub.s32 0, %v798
        %v800 = vsel %vm794, %v799, %v798
        %vm801 = vcmp.lt.s32.totalorder %v787, 0
        %v802 = vsub.s32 0, %v787
        %v803 = vsel %vm801, %v802, %v787
        %v804 = vshrl.u32 %v803, 4
        %v805 = vand.u32 %v803, 15
        %v806 = vsub.s32 0, %v805
        %v807 = vsel %vm801, %v806, %v805
        %vm808 = vcmp.lt.s32.totalorder %v788, 0
        %v809 = vsub.s32 0, %v788
        %v810 = vsel %vm808, %v809, %v788
        %v811 = vshrl.u32 %v810, 4
        %v812 = vand.u32 %v810, 15
        %v813 = vsub.s32 0, %v812
        %v814 = vsel %vm808, %v813, %v812
        %vm815 = vcmp.lt.s32.totalorder %v789, 0
        %v816 = vsub.s32 0, %v789
        %v817 = vsel %vm815, %v816, %v789
        %v818 = vshrl.u32 %v817, 4
        %v819 = vand.u32 %v817, 15
        %v820 = vsub.s32 0, %v819
        %v821 = vsel %vm815, %v820, %v819
        %vm822 = vcmp.lt.s32.totalorder %v790, 0
        %v823 = vsub.s32 0, %v790
        %v824 = vsel %vm822, %v823, %v790
        %v825 = vshrl.u32 %v824, 4
        %v826 = vand.u32 %v824, 15
        %v827 = vsub.s32 0, %v826
        %v828 = vsel %vm822, %v827, %v826
        %vm829 = vcmp.lt.s32.totalorder %v791, 0
        %v830 = vsub.s32 0, %v791
        %v831 = vsel %vm829, %v830, %v791
        %v832 = vshrl.u32 %v831, 4
        %v833 = vand.u32 %v831, 15
        %v834 = vsub.s32 0, %v833
        %v835 = vsel %vm829, %v834, %v833
        %vm836 = vcmp.lt.s32.totalorder %v792, 0
        %v837 = vsub.s32 0, %v792
        %v838 = vsel %vm836, %v837, %v792
        %v839 = vshrl.u32 %v838, 4
        %v840 = vand.u32 %v838, 15
        %v841 = vsub.s32 0, %v840
        %v842 = vsel %vm836, %v841, %v840
        %vm843 = vcmp.lt.s32.totalorder %v793, 0
        %v844 = vsub.s32 0, %v793
        %v845 = vsel %vm843, %v844, %v793
        %v846 = vshrl.u32 %v845, 4
        %v847 = vand.u32 %v845, 15
        %v848 = vsub.s32 0, %v847
        %v849 = vsel %vm843, %v848, %v847
        %vm850 = vcmp.ne.s32.totalorder %v800, 0
        %vm851 = vcmp.ne.s32.totalorder %v807, 0
        %vm852 = vcmp.ne.s32.totalorder %v814, 0
        %vm853 = vcmp.ne.s32.totalorder %v821, 0
        %vm854 = vcmp.ne.s32.totalorder %v828, 0
        %vm855 = vcmp.ne.s32.totalorder %v835, 0
        %vm856 = vcmp.ne.s32.totalorder %v842, 0
        %vm857 = vcmp.ne.s32.totalorder %v849, 0
        %vm858 = vcmp.lt.s32.totalorder %v800, 0
        %vm859 = vcmp.lt.s32.totalorder %v807, 0
        %vm860 = vcmp.lt.s32.totalorder %v814, 0
        %vm861 = vcmp.lt.s32.totalorder %v821, 0
        %vm862 = vcmp.lt.s32.totalorder %v828, 0
        %vm863 = vcmp.lt.s32.totalorder %v835, 0
        %vm864 = vcmp.lt.s32.totalorder %v842, 0
        %vm865 = vcmp.lt.s32.totalorder %v849, 0
        %vm866 = vmand %vm858, %vm850
        %vm867 = vmand %vm859, %vm851
        %vm868 = vmand %vm860, %vm852
        %vm869 = vmand %vm861, %vm853
        %vm870 = vmand %vm862, %vm854
        %vm871 = vmand %vm863, %vm855
        %vm872 = vmand %vm864, %vm856
        %vm873 = vmand %vm865, %vm857
        %v874 = vadd.s32 %v800, 16
        %v875 = vadd.s32 %v807, 16
        %v876 = vadd.s32 %v814, 16
        %v877 = vadd.s32 %v821, 16
        %v878 = vadd.s32 %v828, 16
        %v879 = vadd.s32 %v835, 16
        %v880 = vadd.s32 %v842, 16
        %v881 = vadd.s32 %v849, 16
        %v882 = vsel %vm866, %v874, %v800
        %v883 = vsel %vm867, %v875, %v807
        %v884 = vsel %vm868, %v876, %v814
        %v885 = vsel %vm869, %v877, %v821
        %v886 = vsel %vm870, %v878, %v828
        %v887 = vsel %vm871, %v879, %v835
        %v888 = vsel %vm872, %v880, %v842
        %v889 = vsel %vm873, %v881, %v849
        %vm890 = vcmp.lt.s32.totalorder %v882, 15
        %vm891 = vcmp.lt.s32.totalorder %v883, 15
        %vm892 = vcmp.lt.s32.totalorder %v884, 15
        %vm893 = vcmp.lt.s32.totalorder %v885, 15
        %vm894 = vcmp.lt.s32.totalorder %v886, 15
        %vm895 = vcmp.lt.s32.totalorder %v887, 15
        %vm896 = vcmp.lt.s32.totalorder %v888, 15
        %vm897 = vcmp.lt.s32.totalorder %v889, 15
        %v898 = vsel %vm890, %v738, -3.4028235e+38
        %v899 = vsel %vm891, %v740, -3.4028235e+38
        %v900 = vsel %vm892, %v742, -3.4028235e+38
        %v901 = vsel %vm893, %v744, -3.4028235e+38
        %v902 = vsel %vm894, %v746, -3.4028235e+38
        %v903 = vsel %vm895, %v748, -3.4028235e+38
        %v904 = vsel %vm896, %v750, -3.4028235e+38
        %v905 = vsel %vm897, %v759, -3.4028235e+38
        %vm906 = vcmp.lt.s32.totalorder %v882, 14
        %vm907 = vcmp.lt.s32.totalorder %v883, 14
        %vm908 = vcmp.lt.s32.totalorder %v884, 14
        %vm909 = vcmp.lt.s32.totalorder %v885, 14
        %vm910 = vcmp.lt.s32.totalorder %v886, 14
        %vm911 = vcmp.lt.s32.totalorder %v887, 14
        %vm912 = vcmp.lt.s32.totalorder %v888, 14
        %vm913 = vcmp.lt.s32.totalorder %v889, 14
        %v914 = vsel %vm906, %v763, -3.4028235e+38
        %v915 = vsel %vm907, %v765, -3.4028235e+38
        %v916 = vsel %vm908, %v767, -3.4028235e+38
        %v917 = vsel %vm909, %v769, -3.4028235e+38
        %v918 = vsel %vm910, %v771, -3.4028235e+38
        %v919 = vsel %vm911, %v773, -3.4028235e+38
        %v920 = vsel %vm912, %v775, -3.4028235e+38
        %v921 = vsel %vm913, %v784, -3.4028235e+38
        %v922 = vmax.f32 %v898, %v914
        %v923 = vmax.f32 %v899, %v915
        %v924 = vmax.f32 %v900, %v916
        %v925 = vmax.f32 %v901, %v917
        %v926 = vmax.f32 %v902, %v918
        %v927 = vmax.f32 %v903, %v919
        %v928 = vmax.f32 %v904, %v920
        %v929 = vmax.f32 %v905, %v921
        %v930 = vmax.f32 %v697, %v922
        %v931 = vmax.f32 %v701, %v923
        %v932 = vmax.f32 %v705, %v924
        %v933 = vmax.f32 %v709, %v925
        %v934 = vmax.f32 %v713, %v926
        %v935 = vmax.f32 %v717, %v927
        %v936 = vmax.f32 %v721, %v928
        %v937 = vmax.f32 %v725, %v929
        %v938 = vld [vmem:[#allocation6] sm:$0x3f]
        %v940 = vsel %vm326, %v938, 0
        %942 = vmatpush.msra.mxu0 0.0
        %943 = vmatpush.msra.mxu0 0.0
        %944 = vmatpush.msra.mxu0 0.0
        %945 = vmatpush.msra.mxu0 0.0
        %946 = vmatpush.msra.mxu0 0.0
        %947 = vmatpush.msra.mxu0 0.0
        %948 = vmatpush.msra.mxu0 0.0
        %949 = vmatpush.msra.mxu0 0.0
        %950 = vmatpush.msra.mxu0 0.0
        %951 = vmatpush.msra.mxu0 0.0
        %952 = vmatpush.msra.mxu0 0.0
        %953 = vmatpush.msra.mxu0 0.0
        %954 = vmatpush.msra.mxu0 0.0
        %955 = vmatpush.msra.mxu0 0.0
        %v956 = vand.u32 %v931, 4294901760
        %957 = vmatpush.msra.mxu0 %v956
        %v958 = vand.u32 %v930, 4294901760
        %959 = vmatpush.msra.mxu0 %v958
        %v960 = vand.u32 %v940, 4294901760
        %v961 = vsub.f32 %v940, %v960
        %v962 = vand.u32 %v961, 4294901760
        %v963 = vsub.f32 %v961, %v962
        %v964 = vand.u32 %v963, 4294901760
        %965 = vmatmul.f32.gmra.mxu0 %v964
        %v966 = vpop.f32.mrf.mxu0
        %v967 = vadd.f32 0.0, %v966
        %968 = vdwg.mxu0
        %969 = vmatpush.msra.mxu0 0.0
        %970 = vmatpush.msra.mxu0 0.0
        %971 = vmatpush.msra.mxu0 0.0
        %972 = vmatpush.msra.mxu0 0.0
        %973 = vmatpush.msra.mxu0 0.0
        %974 = vmatpush.msra.mxu0 0.0
        %975 = vmatpush.msra.mxu0 0.0
        %976 = vmatpush.msra.mxu0 0.0
        %977 = vmatpush.msra.mxu0 0.0
        %978 = vmatpush.msra.mxu0 0.0
        %979 = vmatpush.msra.mxu0 0.0
        %980 = vmatpush.msra.mxu0 0.0
        %981 = vmatpush.msra.mxu0 0.0
        %982 = vmatpush.msra.mxu0 0.0
        %v983 = vand.u32 %v931, 4294901760
        %v984 = vsub.f32 %v931, %v983
        %v985 = vand.u32 %v984, 4294901760
        %v986 = vsub.f32 %v984, %v985
        %v987 = vand.u32 %v986, 4294901760
        %988 = vmatpush.msra.mxu0 %v987
        %v989 = vand.u32 %v930, 4294901760
        %v990 = vsub.f32 %v930, %v989
        %v991 = vand.u32 %v990, 4294901760
        %v992 = vsub.f32 %v990, %v991
        %v993 = vand.u32 %v992, 4294901760
        %994 = vmatpush.msra.mxu0 %v993
        %v995 = vand.u32 %v940, 4294901760
        %996 = vmatmul.f32.gmra.mxu0 %v995
        %v997 = vpop.f32.mrf.mxu0
        %v998 = vadd.f32 %v967, %v997
        %999 = vdwg.mxu0
        %1000 = vmatpush.msra.mxu0 0.0
        %1001 = vmatpush.msra.mxu0 0.0
        %1002 = vmatpush.msra.mxu0 0.0
        %1003 = vmatpush.msra.mxu0 0.0
        %1004 = vmatpush.msra.mxu0 0.0
        %1005 = vmatpush.msra.mxu0 0.0
        %1006 = vmatpush.msra.mxu0 0.0
        %1007 = vmatpush.msra.mxu0 0.0
        %1008 = vmatpush.msra.mxu0 0.0
        %1009 = vmatpush.msra.mxu0 0.0
        %1010 = vmatpush.msra.mxu0 0.0
        %1011 = vmatpush.msra.mxu0 0.0
        %1012 = vmatpush.msra.mxu0 0.0
        %1013 = vmatpush.msra.mxu0 0.0
        %v1014 = vand.u32 %v931, 4294901760
        %v1015 = vsub.f32 %v931, %v1014
        %1016 = vmatpush.msra.mxu0 %v1015
        %v1017 = vand.u32 %v930, 4294901760
        %v1018 = vsub.f32 %v930, %v1017
        %1019 = vmatpush.msra.mxu0 %v1018
        %v1020 = vand.u32 %v940, 4294901760
        %v1021 = vsub.f32 %v940, %v1020
        %1022 = vmatmul.f32.gmra.mxu0 %v1021
        %v1023 = vpop.f32.mrf.mxu0
        %v1024 = vadd.f32 %v998, %v1023
        %1025 = vdwg.mxu0
        %1026 = vmatpush.msra.mxu0 0.0
        %1027 = vmatpush.msra.mxu0 0.0
        %1028 = vmatpush.msra.mxu0 0.0
        %1029 = vmatpush.msra.mxu0 0.0
        %1030 = vmatpush.msra.mxu0 0.0
        %1031 = vmatpush.msra.mxu0 0.0
        %1032 = vmatpush.msra.mxu0 0.0
        %1033 = vmatpush.msra.mxu0 0.0
        %1034 = vmatpush.msra.mxu0 0.0
        %1035 = vmatpush.msra.mxu0 0.0
        %1036 = vmatpush.msra.mxu0 0.0
        %1037 = vmatpush.msra.mxu0 0.0
        %1038 = vmatpush.msra.mxu0 0.0
        %1039 = vmatpush.msra.mxu0 0.0
        %v1040 = vand.u32 %v931, 4294901760
        %1041 = vmatpush.msra.mxu0 %v1040
        %v1042 = vand.u32 %v930, 4294901760
        %1043 = vmatpush.msra.mxu0 %v1042
        %v1044 = vand.u32 %v940, 4294901760
        %v1045 = vsub.f32 %v940, %v1044
        %v1046 = vand.u32 %v1045, 4294901760
        %1047 = vmatmul.f32.gmra.mxu0 %v1046
        %v1048 = vpop.f32.mrf.mxu0
        %v1049 = vadd.f32 %v1024, %v1048
        %1050 = vdwg.mxu0
        %1051 = vmatpush.msra.mxu0 0.0
        %1052 = vmatpush.msra.mxu0 0.0
        %1053 = vmatpush.msra.mxu0 0.0
        %1054 = vmatpush.msra.mxu0 0.0
        %1055 = vmatpush.msra.mxu0 0.0
        %1056 = vmatpush.msra.mxu0 0.0
        %1057 = vmatpush.msra.mxu0 0.0
        %1058 = vmatpush.msra.mxu0 0.0
        %1059 = vmatpush.msra.mxu0 0.0
        %1060 = vmatpush.msra.mxu0 0.0
        %1061 = vmatpush.msra.mxu0 0.0
        %1062 = vmatpush.msra.mxu0 0.0
        %1063 = vmatpush.msra.mxu0 0.0
        %1064 = vmatpush.msra.mxu0 0.0
        %v1065 = vand.u32 %v931, 4294901760
        %v1066 = vsub.f32 %v931, %v1065
        %v1067 = vand.u32 %v1066, 4294901760
        %1068 = vmatpush.msra.mxu0 %v1067
        %v1069 = vand.u32 %v930, 4294901760
        %v1070 = vsub.f32 %v930, %v1069
        %v1071 = vand.u32 %v1070, 4294901760
        %1072 = vmatpush.msra.mxu0 %v1071
        %v1073 = vand.u32 %v940, 4294901760
        %1074 = vmatmul.f32.gmra.mxu0 %v1073
        %v1075 = vpop.f32.mrf.mxu0
        %v1076 = vadd.f32 %v1049, %v1075
        %1077 = vdwg.mxu0
        %1078 = vmatpush.msra.mxu0 0.0
        %1079 = vmatpush.msra.mxu0 0.0
        %1080 = vmatpush.msra.mxu0 0.0
        %1081 = vmatpush.msra.mxu0 0.0
        %1082 = vmatpush.msra.mxu0 0.0
        %1083 = vmatpush.msra.mxu0 0.0
        %1084 = vmatpush.msra.mxu0 0.0
        %1085 = vmatpush.msra.mxu0 0.0
        %1086 = vmatpush.msra.mxu0 0.0
        %1087 = vmatpush.msra.mxu0 0.0
        %1088 = vmatpush.msra.mxu0 0.0
        %1089 = vmatpush.msra.mxu0 0.0
        %1090 = vmatpush.msra.mxu0 0.0
        %1091 = vmatpush.msra.mxu0 0.0
        %v1092 = vand.u32 %v931, 4294901760
        %1093 = vmatpush.msra.mxu0 %v1092
        %v1094 = vand.u32 %v930, 4294901760
        %1095 = vmatpush.msra.mxu0 %v1094
        %v1096 = vand.u32 %v940, 4294901760
        %1097 = vmatmul.f32.gmra.mxu0 %v1096
        %v1098 = vpop.f32.mrf.mxu0
        %v1099 = vadd.f32 %v1076, %v1098
        %1100 = vdwg.mxu0
        %vm1101 = vcmask 46080
        %1102 = vst.msk [vmem:[%s224] sm:$0x3f] %vm1101, %v1099
        %1103 = vmatpush.msra.mxu0 0.0
        %1104 = vmatpush.msra.mxu0 0.0
        %1105 = vmatpush.msra.mxu0 0.0
        %1106 = vmatpush.msra.mxu0 0.0
        %1107 = vmatpush.msra.mxu0 0.0
        %1108 = vmatpush.msra.mxu0 0.0
        %1109 = vmatpush.msra.mxu0 0.0
        %1110 = vmatpush.msra.mxu0 0.0
        %1111 = vmatpush.msra.mxu0 0.0
        %1112 = vmatpush.msra.mxu0 0.0
        %1113 = vmatpush.msra.mxu0 0.0
        %1114 = vmatpush.msra.mxu0 0.0
        %1115 = vmatpush.msra.mxu0 0.0
        %1116 = vmatpush.msra.mxu0 0.0
        %v1117 = vand.u32 %v933, 4294901760
        %1118 = vmatpush.msra.mxu0 %v1117
        %v1119 = vand.u32 %v932, 4294901760
        %1120 = vmatpush.msra.mxu0 %v1119
        %v1121 = vand.u32 %v940, 4294901760
        %v1122 = vsub.f32 %v940, %v1121
        %v1123 = vand.u32 %v1122, 4294901760
        %v1124 = vsub.f32 %v1122, %v1123
        %v1125 = vand.u32 %v1124, 4294901760
        %1126 = vmatmul.f32.gmra.mxu0 %v1125
        %v1127 = vpop.f32.mrf.mxu0
        %v1128 = vadd.f32 0.0, %v1127
        %1129 = vdwg.mxu0
        %1130 = vmatpush.msra.mxu0 0.0
        %1131 = vmatpush.msra.mxu0 0.0
        %1132 = vmatpush.msra.mxu0 0.0
        %1133 = vmatpush.msra.mxu0 0.0
        %1134 = vmatpush.msra.mxu0 0.0
        %1135 = vmatpush.msra.mxu0 0.0
        %1136 = vmatpush.msra.mxu0 0.0
        %1137 = vmatpush.msra.mxu0 0.0
        %1138 = vmatpush.msra.mxu0 0.0
        %1139 = vmatpush.msra.mxu0 0.0
        %1140 = vmatpush.msra.mxu0 0.0
        %1141 = vmatpush.msra.mxu0 0.0
        %1142 = vmatpush.msra.mxu0 0.0
        %1143 = vmatpush.msra.mxu0 0.0
        %v1144 = vand.u32 %v933, 4294901760
        %v1145 = vsub.f32 %v933, %v1144
        %v1146 = vand.u32 %v1145, 4294901760
        %v1147 = vsub.f32 %v1145, %v1146
        %v1148 = vand.u32 %v1147, 4294901760
        %1149 = vmatpush.msra.mxu0 %v1148
        %v1150 = vand.u32 %v932, 4294901760
        %v1151 = vsub.f32 %v932, %v1150
        %v1152 = vand.u32 %v1151, 4294901760
        %v1153 = vsub.f32 %v1151, %v1152
        %v1154 = vand.u32 %v1153, 4294901760
        %1155 = vmatpush.msra.mxu0 %v1154
        %v1156 = vand.u32 %v940, 4294901760
        %1157 = vmatmul.f32.gmra.mxu0 %v1156
        %v1158 = vpop.f32.mrf.mxu0
        %v1159 = vadd.f32 %v1128, %v1158
        %1160 = vdwg.mxu0
        %1161 = vmatpush.msra.mxu0 0.0
        %1162 = vmatpush.msra.mxu0 0.0
        %1163 = vmatpush.msra.mxu0 0.0
        %1164 = vmatpush.msra.mxu0 0.0
        %1165 = vmatpush.msra.mxu0 0.0
        %1166 = vmatpush.msra.mxu0 0.0
        %1167 = vmatpush.msra.mxu0 0.0
        %1168 = vmatpush.msra.mxu0 0.0
        %1169 = vmatpush.msra.mxu0 0.0
        %1170 = vmatpush.msra.mxu0 0.0
        %1171 = vmatpush.msra.mxu0 0.0
        %1172 = vmatpush.msra.mxu0 0.0
        %1173 = vmatpush.msra.mxu0 0.0
        %1174 = vmatpush.msra.mxu0 0.0
        %v1175 = vand.u32 %v933, 4294901760
        %v1176 = vsub.f32 %v933, %v1175
        %1177 = vmatpush.msra.mxu0 %v1176
        %v1178 = vand.u32 %v932, 4294901760
        %v1179 = vsub.f32 %v932, %v1178
        %1180 = vmatpush.msra.mxu0 %v1179
        %v1181 = vand.u32 %v940, 4294901760
        %v1182 = vsub.f32 %v940, %v1181
        %1183 = vmatmul.f32.gmra.mxu0 %v1182
        %v1184 = vpop.f32.mrf.mxu0
        %v1185 = vadd.f32 %v1159, %v1184
        %1186 = vdwg.mxu0
        %1187 = vmatpush.msra.mxu0 0.0
        %1188 = vmatpush.msra.mxu0 0.0
        %1189 = vmatpush.msra.mxu0 0.0
        %1190 = vmatpush.msra.mxu0 0.0
        %1191 = vmatpush.msra.mxu0 0.0
        %1192 = vmatpush.msra.mxu0 0.0
        %1193 = vmatpush.msra.mxu0 0.0
        %1194 = vmatpush.msra.mxu0 0.0
        %1195 = vmatpush.msra.mxu0 0.0
        %1196 = vmatpush.msra.mxu0 0.0
        %1197 = vmatpush.msra.mxu0 0.0
        %1198 = vmatpush.msra.mxu0 0.0
        %1199 = vmatpush.msra.mxu0 0.0
        %1200 = vmatpush.msra.mxu0 0.0
        %v1201 = vand.u32 %v933, 4294901760
        %1202 = vmatpush.msra.mxu0 %v1201
        %v1203 = vand.u32 %v932, 4294901760
        %1204 = vmatpush.msra.mxu0 %v1203
        %v1205 = vand.u32 %v940, 4294901760
        %v1206 = vsub.f32 %v940, %v1205
        %v1207 = vand.u32 %v1206, 4294901760
        %1208 = vmatmul.f32.gmra.mxu0 %v1207
        %v1209 = vpop.f32.mrf.mxu0
        %v1210 = vadd.f32 %v1185, %v1209
        %1211 = vdwg.mxu0
        %1212 = vmatpush.msra.mxu0 0.0
        %1213 = vmatpush.msra.mxu0 0.0
        %1214 = vmatpush.msra.mxu0 0.0
        %1215 = vmatpush.msra.mxu0 0.0
        %1216 = vmatpush.msra.mxu0 0.0
        %1217 = vmatpush.msra.mxu0 0.0
        %1218 = vmatpush.msra.mxu0 0.0
        %1219 = vmatpush.msra.mxu0 0.0
        %1220 = vmatpush.msra.mxu0 0.0
        %1221 = vmatpush.msra.mxu0 0.0
        %1222 = vmatpush.msra.mxu0 0.0
        %1223 = vmatpush.msra.mxu0 0.0
        %1224 = vmatpush.msra.mxu0 0.0
        %1225 = vmatpush.msra.mxu0 0.0
        %v1226 = vand.u32 %v933, 4294901760
        %v1227 = vsub.f32 %v933, %v1226
        %v1228 = vand.u32 %v1227, 4294901760
        %1229 = vmatpush.msra.mxu0 %v1228
        %v1230 = vand.u32 %v932, 4294901760
        %v1231 = vsub.f32 %v932, %v1230
        %v1232 = vand.u32 %v1231, 4294901760
        %1233 = vmatpush.msra.mxu0 %v1232
        %v1234 = vand.u32 %v940, 4294901760
        %1235 = vmatmul.f32.gmra.mxu0 %v1234
        %v1236 = vpop.f32.mrf.mxu0
        %v1237 = vadd.f32 %v1210, %v1236
        %1238 = vdwg.mxu0
        %1239 = vmatpush.msra.mxu0 0.0
        %1240 = vmatpush.msra.mxu0 0.0
        %1241 = vmatpush.msra.mxu0 0.0
        %1242 = vmatpush.msra.mxu0 0.0
        %1243 = vmatpush.msra.mxu0 0.0
        %1244 = vmatpush.msra.mxu0 0.0
        %1245 = vmatpush.msra.mxu0 0.0
        %1246 = vmatpush.msra.mxu0 0.0
        %1247 = vmatpush.msra.mxu0 0.0
        %1248 = vmatpush.msra.mxu0 0.0
        %1249 = vmatpush.msra.mxu0 0.0
        %1250 = vmatpush.msra.mxu0 0.0
        %1251 = vmatpush.msra.mxu0 0.0
        %1252 = vmatpush.msra.mxu0 0.0
        %v1253 = vand.u32 %v933, 4294901760
        %1254 = vmatpush.msra.mxu0 %v1253
        %v1255 = vand.u32 %v932, 4294901760
        %1256 = vmatpush.msra.mxu0 %v1255
        %v1257 = vand.u32 %v940, 4294901760
        %1258 = vmatmul.f32.gmra.mxu0 %v1257
        %v1259 = vpop.f32.mrf.mxu0
        %v1260 = vadd.f32 %v1237, %v1259
        %1261 = vdwg.mxu0
        %1262 = vst.msk [vmem:[%s224 + $0x6] sm:$0x3f] %vm1101, %v1260
        %1263 = vmatpush.msra.mxu0 0.0
        %1264 = vmatpush.msra.mxu0 0.0
        %1265 = vmatpush.msra.mxu0 0.0
        %1266 = vmatpush.msra.mxu0 0.0
        %1267 = vmatpush.msra.mxu0 0.0
        %1268 = vmatpush.msra.mxu0 0.0
        %1269 = vmatpush.msra.mxu0 0.0
        %1270 = vmatpush.msra.mxu0 0.0
        %1271 = vmatpush.msra.mxu0 0.0
        %1272 = vmatpush.msra.mxu0 0.0
        %1273 = vmatpush.msra.mxu0 0.0
        %1274 = vmatpush.msra.mxu0 0.0
        %1275 = vmatpush.msra.mxu0 0.0
        %1276 = vmatpush.msra.mxu0 0.0
        %v1277 = vand.u32 %v935, 4294901760
        %1278 = vmatpush.msra.mxu0 %v1277
        %v1279 = vand.u32 %v934, 4294901760
        %1280 = vmatpush.msra.mxu0 %v1279
        %v1281 = vand.u32 %v940, 4294901760
        %v1282 = vsub.f32 %v940, %v1281
        %v1283 = vand.u32 %v1282, 4294901760
        %v1284 = vsub.f32 %v1282, %v1283
        %v1285 = vand.u32 %v1284, 4294901760
        %1286 = vmatmul.f32.gmra.mxu0 %v1285
        %v1287 = vpop.f32.mrf.mxu0
        %v1288 = vadd.f32 0.0, %v1287
        %1289 = vdwg.mxu0
        %1290 = vmatpush.msra.mxu0 0.0
        %1291 = vmatpush.msra.mxu0 0.0
        %1292 = vmatpush.msra.mxu0 0.0
        %1293 = vmatpush.msra.mxu0 0.0
        %1294 = vmatpush.msra.mxu0 0.0
        %1295 = vmatpush.msra.mxu0 0.0
        %1296 = vmatpush.msra.mxu0 0.0
        %1297 = vmatpush.msra.mxu0 0.0
        %1298 = vmatpush.msra.mxu0 0.0
        %1299 = vmatpush.msra.mxu0 0.0
        %1300 = vmatpush.msra.mxu0 0.0
        %1301 = vmatpush.msra.mxu0 0.0
        %1302 = vmatpush.msra.mxu0 0.0
        %1303 = vmatpush.msra.mxu0 0.0
        %v1304 = vand.u32 %v935, 4294901760
        %v1305 = vsub.f32 %v935, %v1304
        %v1306 = vand.u32 %v1305, 4294901760
        %v1307 = vsub.f32 %v1305, %v1306
        %v1308 = vand.u32 %v1307, 4294901760
        %1309 = vmatpush.msra.mxu0 %v1308
        %v1310 = vand.u32 %v934, 4294901760
        %v1311 = vsub.f32 %v934, %v1310
        %v1312 = vand.u32 %v1311, 4294901760
        %v1313 = vsub.f32 %v1311, %v1312
        %v1314 = vand.u32 %v1313, 4294901760
        %1315 = vmatpush.msra.mxu0 %v1314
        %v1316 = vand.u32 %v940, 4294901760
        %1317 = vmatmul.f32.gmra.mxu0 %v1316
        %v1318 = vpop.f32.mrf.mxu0
        %v1319 = vadd.f32 %v1288, %v1318
        %1320 = vdwg.mxu0
        %1321 = vmatpush.msra.mxu0 0.0
        %1322 = vmatpush.msra.mxu0 0.0
        %1323 = vmatpush.msra.mxu0 0.0
        %1324 = vmatpush.msra.mxu0 0.0
        %1325 = vmatpush.msra.mxu0 0.0
        %1326 = vmatpush.msra.mxu0 0.0
        %1327 = vmatpush.msra.mxu0 0.0
        %1328 = vmatpush.msra.mxu0 0.0
        %1329 = vmatpush.msra.mxu0 0.0
        %1330 = vmatpush.msra.mxu0 0.0
        %1331 = vmatpush.msra.mxu0 0.0
        %1332 = vmatpush.msra.mxu0 0.0
        %1333 = vmatpush.msra.mxu0 0.0
        %1334 = vmatpush.msra.mxu0 0.0
        %v1335 = vand.u32 %v935, 4294901760
        %v1336 = vsub.f32 %v935, %v1335
        %1337 = vmatpush.msra.mxu0 %v1336
        %v1338 = vand.u32 %v934, 4294901760
        %v1339 = vsub.f32 %v934, %v1338
        %1340 = vmatpush.msra.mxu0 %v1339
        %v1341 = vand.u32 %v940, 4294901760
        %v1342 = vsub.f32 %v940, %v1341
        %1343 = vmatmul.f32.gmra.mxu0 %v1342
        %v1344 = vpop.f32.mrf.mxu0
        %v1345 = vadd.f32 %v1319, %v1344
        %1346 = vdwg.mxu0
        %1347 = vmatpush.msra.mxu0 0.0
        %1348 = vmatpush.msra.mxu0 0.0
        %1349 = vmatpush.msra.mxu0 0.0
        %1350 = vmatpush.msra.mxu0 0.0
        %1351 = vmatpush.msra.mxu0 0.0
        %1352 = vmatpush.msra.mxu0 0.0
        %1353 = vmatpush.msra.mxu0 0.0
        %1354 = vmatpush.msra.mxu0 0.0
        %1355 = vmatpush.msra.mxu0 0.0
        %1356 = vmatpush.msra.mxu0 0.0
        %1357 = vmatpush.msra.mxu0 0.0
        %1358 = vmatpush.msra.mxu0 0.0
        %1359 = vmatpush.msra.mxu0 0.0
        %1360 = vmatpush.msra.mxu0 0.0
        %v1361 = vand.u32 %v935, 4294901760
        %1362 = vmatpush.msra.mxu0 %v1361
        %v1363 = vand.u32 %v934, 4294901760
        %1364 = vmatpush.msra.mxu0 %v1363
        %v1365 = vand.u32 %v940, 4294901760
        %v1366 = vsub.f32 %v940, %v1365
        %v1367 = vand.u32 %v1366, 4294901760
        %1368 = vmatmul.f32.gmra.mxu0 %v1367
        %v1369 = vpop.f32.mrf.mxu0
        %v1370 = vadd.f32 %v1345, %v1369
        %1371 = vdwg.mxu0
        %1372 = vmatpush.msra.mxu0 0.0
        %1373 = vmatpush.msra.mxu0 0.0
        %1374 = vmatpush.msra.mxu0 0.0
        %1375 = vmatpush.msra.mxu0 0.0
        %1376 = vmatpush.msra.mxu0 0.0
        %1377 = vmatpush.msra.mxu0 0.0
        %1378 = vmatpush.msra.mxu0 0.0
        %1379 = vmatpush.msra.mxu0 0.0
        %1380 = vmatpush.msra.mxu0 0.0
        %1381 = vmatpush.msra.mxu0 0.0
        %1382 = vmatpush.msra.mxu0 0.0
        %1383 = vmatpush.msra.mxu0 0.0
        %1384 = vmatpush.msra.mxu0 0.0
        %1385 = vmatpush.msra.mxu0 0.0
        %v1386 = vand.u32 %v935, 4294901760
        %v1387 = vsub.f32 %v935, %v1386
        %v1388 = vand.u32 %v1387, 4294901760
        %1389 = vmatpush.msra.mxu0 %v1388
        %v1390 = vand.u32 %v934, 4294901760
        %v1391 = vsub.f32 %v934, %v1390
        %v1392 = vand.u32 %v1391, 4294901760
        %1393 = vmatpush.msra.mxu0 %v1392
        %v1394 = vand.u32 %v940, 4294901760
        %1395 = vmatmul.f32.gmra.mxu0 %v1394
        %v1396 = vpop.f32.mrf.mxu0
        %v1397 = vadd.f32 %v1370, %v1396
        %1398 = vdwg.mxu0
        %1399 = vmatpush.msra.mxu0 0.0
        %1400 = vmatpush.msra.mxu0 0.0
        %1401 = vmatpush.msra.mxu0 0.0
        %1402 = vmatpush.msra.mxu0 0.0
        %1403 = vmatpush.msra.mxu0 0.0
        %1404 = vmatpush.msra.mxu0 0.0
        %1405 = vmatpush.msra.mxu0 0.0
        %1406 = vmatpush.msra.mxu0 0.0
        %1407 = vmatpush.msra.mxu0 0.0
        %1408 = vmatpush.msra.mxu0 0.0
        %1409 = vmatpush.msra.mxu0 0.0
        %1410 = vmatpush.msra.mxu0 0.0
        %1411 = vmatpush.msra.mxu0 0.0
        %1412 = vmatpush.msra.mxu0 0.0
        %v1413 = vand.u32 %v935, 4294901760
        %1414 = vmatpush.msra.mxu0 %v1413
        %v1415 = vand.u32 %v934, 4294901760
        %1416 = vmatpush.msra.mxu0 %v1415
        %v1417 = vand.u32 %v940, 4294901760
        %1418 = vmatmul.f32.gmra.mxu0 %v1417
        %v1419 = vpop.f32.mrf.mxu0
        %v1420 = vadd.f32 %v1397, %v1419
        %1421 = vdwg.mxu0
        %1422 = vst.msk [vmem:[%s224 + $0xc] sm:$0x3f] %vm1101, %v1420
        %1423 = vmatpush.msra.mxu0 0.0
        %1424 = vmatpush.msra.mxu0 0.0
        %1425 = vmatpush.msra.mxu0 0.0
        %1426 = vmatpush.msra.mxu0 0.0
        %1427 = vmatpush.msra.mxu0 0.0
        %1428 = vmatpush.msra.mxu0 0.0
        %1429 = vmatpush.msra.mxu0 0.0
        %1430 = vmatpush.msra.mxu0 0.0
        %1431 = vmatpush.msra.mxu0 0.0
        %1432 = vmatpush.msra.mxu0 0.0
        %1433 = vmatpush.msra.mxu0 0.0
        %1434 = vmatpush.msra.mxu0 0.0
        %1435 = vmatpush.msra.mxu0 0.0
        %1436 = vmatpush.msra.mxu0 0.0
        %v1437 = vand.u32 %v937, 4294901760
        %1438 = vmatpush.msra.mxu0 %v1437
        %v1439 = vand.u32 %v936, 4294901760
        %1440 = vmatpush.msra.mxu0 %v1439
        %v1441 = vand.u32 %v940, 4294901760
        %v1442 = vsub.f32 %v940, %v1441
        %v1443 = vand.u32 %v1442, 4294901760
        %v1444 = vsub.f32 %v1442, %v1443
        %v1445 = vand.u32 %v1444, 4294901760
        %1446 = vmatmul.f32.gmra.mxu0 %v1445
        %v1447 = vpop.f32.mrf.mxu0
        %v1448 = vadd.f32 0.0, %v1447
        %1449 = vdwg.mxu0
        %1450 = vmatpush.msra.mxu0 0.0
        %1451 = vmatpush.msra.mxu0 0.0
        %1452 = vmatpush.msra.mxu0 0.0
        %1453 = vmatpush.msra.mxu0 0.0
        %1454 = vmatpush.msra.mxu0 0.0
        %1455 = vmatpush.msra.mxu0 0.0
        %1456 = vmatpush.msra.mxu0 0.0
        %1457 = vmatpush.msra.mxu0 0.0
        %1458 = vmatpush.msra.mxu0 0.0
        %1459 = vmatpush.msra.mxu0 0.0
        %1460 = vmatpush.msra.mxu0 0.0
        %1461 = vmatpush.msra.mxu0 0.0
        %1462 = vmatpush.msra.mxu0 0.0
        %1463 = vmatpush.msra.mxu0 0.0
        %v1464 = vand.u32 %v937, 4294901760
        %v1465 = vsub.f32 %v937, %v1464
        %v1466 = vand.u32 %v1465, 4294901760
        %v1467 = vsub.f32 %v1465, %v1466
        %v1468 = vand.u32 %v1467, 4294901760
        %1469 = vmatpush.msra.mxu0 %v1468
        %v1470 = vand.u32 %v936, 4294901760
        %v1471 = vsub.f32 %v936, %v1470
        %v1472 = vand.u32 %v1471, 4294901760
        %v1473 = vsub.f32 %v1471, %v1472
        %v1474 = vand.u32 %v1473, 4294901760
        %1475 = vmatpush.msra.mxu0 %v1474
        %v1476 = vand.u32 %v940, 4294901760
        %1477 = vmatmul.f32.gmra.mxu0 %v1476
        %v1478 = vpop.f32.mrf.mxu0
        %v1479 = vadd.f32 %v1448, %v1478
        %1480 = vdwg.mxu0
        %1481 = vmatpush.msra.mxu0 0.0
        %1482 = vmatpush.msra.mxu0 0.0
        %1483 = vmatpush.msra.mxu0 0.0
        %1484 = vmatpush.msra.mxu0 0.0
        %1485 = vmatpush.msra.mxu0 0.0
        %1486 = vmatpush.msra.mxu0 0.0
        %1487 = vmatpush.msra.mxu0 0.0
        %1488 = vmatpush.msra.mxu0 0.0
        %1489 = vmatpush.msra.mxu0 0.0
        %1490 = vmatpush.msra.mxu0 0.0
        %1491 = vmatpush.msra.mxu0 0.0
        %1492 = vmatpush.msra.mxu0 0.0
        %1493 = vmatpush.msra.mxu0 0.0
        %1494 = vmatpush.msra.mxu0 0.0
        %v1495 = vand.u32 %v937, 4294901760
        %v1496 = vsub.f32 %v937, %v1495
        %1497 = vmatpush.msra.mxu0 %v1496
        %v1498 = vand.u32 %v936, 4294901760
        %v1499 = vsub.f32 %v936, %v1498
        %1500 = vmatpush.msra.mxu0 %v1499
        %v1501 = vand.u32 %v940, 4294901760
        %v1502 = vsub.f32 %v940, %v1501
        %1503 = vmatmul.f32.gmra.mxu0 %v1502
        %v1504 = vpop.f32.mrf.mxu0
        %v1505 = vadd.f32 %v1479, %v1504
        %1506 = vdwg.mxu0
        %1507 = vmatpush.msra.mxu0 0.0
        %1508 = vmatpush.msra.mxu0 0.0
        %1509 = vmatpush.msra.mxu0 0.0
        %1510 = vmatpush.msra.mxu0 0.0
        %1511 = vmatpush.msra.mxu0 0.0
        %1512 = vmatpush.msra.mxu0 0.0
        %1513 = vmatpush.msra.mxu0 0.0
        %1514 = vmatpush.msra.mxu0 0.0
        %1515 = vmatpush.msra.mxu0 0.0
        %1516 = vmatpush.msra.mxu0 0.0
        %1517 = vmatpush.msra.mxu0 0.0
        %1518 = vmatpush.msra.mxu0 0.0
        %1519 = vmatpush.msra.mxu0 0.0
        %1520 = vmatpush.msra.mxu0 0.0
        %v1521 = vand.u32 %v937, 4294901760
        %1522 = vmatpush.msra.mxu0 %v1521
        %v1523 = vand.u32 %v936, 4294901760
        %1524 = vmatpush.msra.mxu0 %v1523
        %v1525 = vand.u32 %v940, 4294901760
        %v1526 = vsub.f32 %v940, %v1525
        %v1527 = vand.u32 %v1526, 4294901760
        %1528 = vmatmul.f32.gmra.mxu0 %v1527
        %v1529 = vpop.f32.mrf.mxu0
        %v1530 = vadd.f32 %v1505, %v1529
        %1531 = vdwg.mxu0
        %1532 = vmatpush.msra.mxu0 0.0
        %1533 = vmatpush.msra.mxu0 0.0
        %1534 = vmatpush.msra.mxu0 0.0
        %1535 = vmatpush.msra.mxu0 0.0
        %1536 = vmatpush.msra.mxu0 0.0
        %1537 = vmatpush.msra.mxu0 0.0
        %1538 = vmatpush.msra.mxu0 0.0
        %1539 = vmatpush.msra.mxu0 0.0
        %1540 = vmatpush.msra.mxu0 0.0
        %1541 = vmatpush.msra.mxu0 0.0
        %1542 = vmatpush.msra.mxu0 0.0
        %1543 = vmatpush.msra.mxu0 0.0
        %1544 = vmatpush.msra.mxu0 0.0
        %1545 = vmatpush.msra.mxu0 0.0
        %v1546 = vand.u32 %v937, 4294901760
        %v1547 = vsub.f32 %v937, %v1546
        %v1548 = vand.u32 %v1547, 4294901760
        %1549 = vmatpush.msra.mxu0 %v1548
        %v1550 = vand.u32 %v936, 4294901760
        %v1551 = vsub.f32 %v936, %v1550
        %v1552 = vand.u32 %v1551, 4294901760
        %1553 = vmatpush.msra.mxu0 %v1552
        %v1554 = vand.u32 %v940, 4294901760
        %1555 = vmatmul.f32.gmra.mxu0 %v1554
        %v1556 = vpop.f32.mrf.mxu0
        %v1557 = vadd.f32 %v1530, %v1556
        %1558 = vdwg.mxu0
        %1559 = vmatpush.msra.mxu0 0.0
        %1560 = vmatpush.msra.mxu0 0.0
        %1561 = vmatpush.msra.mxu0 0.0
        %1562 = vmatpush.msra.mxu0 0.0
        %1563 = vmatpush.msra.mxu0 0.0
        %1564 = vmatpush.msra.mxu0 0.0
        %1565 = vmatpush.msra.mxu0 0.0
        %1566 = vmatpush.msra.mxu0 0.0
        %1567 = vmatpush.msra.mxu0 0.0
        %1568 = vmatpush.msra.mxu0 0.0
        %1569 = vmatpush.msra.mxu0 0.0
        %1570 = vmatpush.msra.mxu0 0.0
        %1571 = vmatpush.msra.mxu0 0.0
        %1572 = vmatpush.msra.mxu0 0.0
        %v1573 = vand.u32 %v937, 4294901760
        %1574 = vmatpush.msra.mxu0 %v1573
        %v1575 = vand.u32 %v936, 4294901760
        %1576 = vmatpush.msra.mxu0 %v1575
        %v1577 = vand.u32 %v940, 4294901760
        %1578 = vmatmul.f32.gmra.mxu0 %v1577
        %v1579 = vpop.f32.mrf.mxu0
        %v1580 = vadd.f32 %v1557, %v1579
        %1581 = vdwg.mxu0
        %1582 = vst.msk [vmem:[%s224 + $0x12] sm:$0x3f] %vm1101, %v1580
        %s1583 = smul.u32 3, %s18
        %p1584 = scmp.lt.s32.totalorder %s1583, 5
        %s1585 = scalar_select %p1584, %s1583, 5
        %s1586 = smul.addr %s1585, 8
        %s1587 = scalar_lea.vmem %s3, %s1586
        // Predicated region
        $region45: #{maxpool2d_ceil.1} parent=31 // pred_check
          %p1588 = pneg %p104
        $region46: #{maxpool2d_ceil.1} parent=31 // pred_check_branch
          %1590 = sbr.rel (%p1588) target = $region48
        $region47: #{maxpool2d_ceil.1} parent=31 // pred_region
          %s1591 = smul.u32 3, %s18
        $region48: #{maxpool2d_ceil.1} parent=31 // pred_fallthru
          _
      $region32: #{maxpool2d_ceil.1} parent=5 // pred_fallthru
        _
      %p1592 = scmp.le.s32.totalorder 2, %s13
      // Predicated region
      $region49: #{maxpool2d_ceil.1} parent=5 // pred_check
        %p1593 = pneg %p1592
      $region50: #{maxpool2d_ceil.1} parent=5 // pred_check_branch
        %1595 = sbr.rel (%p1593) target = $region52
      $region51: #{maxpool2d_ceil.1} parent=5 // pred_region
        %s1596 = ssub.s32 %s13, 2
        // Predicated region
        $region53: #{maxpool2d_ceil.1} parent=51 // pred_check
          %p1597 = pneg %p110
        $region54: #{maxpool2d_ceil.1} parent=51 // pred_check_branch
          %1599 = sbr.rel (%p1597) target = $region56
        $region55: #{maxpool2d_ceil.1} parent=51 // pred_region
          %s1600 = smul.u32 3, %s19
          %p1601 = scmp.lt.s32.totalorder %s1600, 5
          %s1602 = scalar_select %p1601, %s1600, 5
          %s1603 = smul.addr %s1602, 8
          %s1604 = scalar_lea.vmem %s3, %s1603
        $region56: #{maxpool2d_ceil.1} parent=51 // pred_fallthru
          _
      $region52: #{maxpool2d_ceil.1} parent=5 // pred_fallthru
        _
    $region6: #{maxpool2d_ceil.1} parent=1 // loop_footer
      %s17 = sadd.s32 1, %s13
    $region7: #{maxpool2d_ceil.1} parent=1 // loop_footer_branch
      %12 = sbr.rel target = $region3
    $region8: #{maxpool2d_ceil.1} parent=1 // loop_exit
      _
    %1605 = vsyncpa [#allocation3], 1
    %s1606 = scalar_lea.sflag [#allocation3], 1
    %1607 = vsyncpa %s1606, 1
    %1608 = vsyncpa [#allocation5], 1

</llo_original>
